<compile_context>
chip_gen: v7x
topology: tpu7x:2x2x1
jax: 0.10.0
libtpu: 0.0.40
codegen_flags: <defaults>
</compile_context>

<pallas_src>
import math
from functools import partial

import jax
import jax.numpy as jnp
from jax import lax
from jax.experimental import pallas as pl
from jax.experimental.pallas import tpu as pltpu


def _mha_kernel(q_ref, k_ref, v_ref,
                wq_ref, bq_ref, wk_ref, bk_ref, wv_ref, bv_ref,
                wo_ref, bo_ref,
                o_ref, acc_ref, *, h, bt, n, m, d, approx_reciprocal):
    # q_ref: [bt*n, d] bf16     k_ref/v_ref: [bt*m, d] bf16
    # w*_ref: [d, d] bf16 (pre-transposed to [in, out])   b*_ref: [1, d] f32
    # o_ref: [bt*n, d]          acc_ref: [bt*n, d] f32 VMEM scratch
    p = d // h

    def linear(x_ref, w_ref, b_ref):
        # Plain x @ W (weights pre-transposed host-side) -> no MXU-feed
        # transpose; bf16 operands, f32 accumulation.
        y = lax.dot_general(x_ref[...], w_ref[...], (((1,), (0,)), ((), ())),
                            preferred_element_type=jnp.float32)
        return y + b_ref[0]

    # Projections: one [rows, d] @ [d, d] matmul per weight for the whole
    # batch tile. 1/temperature is already folded into wq/bq host-side.
    # Reshape to [bt, seq, d] while still f32 (seq multiple of 8 -> pure
    # sublane regrouping, no relayout), then cast to bf16 for the MXU.
    Q = linear(q_ref, wq_ref, bq_ref).reshape(bt, n, d).astype(jnp.bfloat16)
    K = linear(k_ref, wk_ref, bk_ref).reshape(bt, m, d).astype(jnp.bfloat16)
    V = linear(v_ref, wv_ref, bv_ref).reshape(bt, m, d).astype(jnp.bfloat16)

    # Fused concat + output projection: accumulate head_out @ wo[head rows]
    # into a single lane-dense [bt*n, d] f32 accumulator.
    acc_ref[...] = jnp.zeros_like(acc_ref)

    # h is small and static: a Python loop keeps the head slices static, and
    # the batch-tile loop is folded into batched dot_generals, so the
    # iteration count is h (not bt*h) and vreg live ranges stay bounded.
    for hi in range(h):
        sl = slice(hi * p, (hi + 1) * p)
        Qh = Q[:, :, sl]                         # [bt, n, p] (1/T already folded)
        Kh = K[:, :, sl]                         # [bt, m, p]
        Vh = V[:, :, sl]                         # [bt, m, p]

        # attention scores [bt, n, m] (batched over bt); softmax over keys in f32
        s = lax.dot_general(Qh, Kh, (((2,), (2,)), ((0,), (0,))),
                            preferred_element_type=jnp.float32)
        s = s - jnp.max(s, axis=2, keepdims=True)
        e = jnp.exp(s)
        denom = jnp.sum(e, axis=2, keepdims=True)
        if approx_reciprocal:
            probs = e * pl.reciprocal(denom, approx=True)   # EUP slot
        else:
            probs = e / denom

        # head output [bt, n, p]; flatten (f32, sublane-clean) and fuse this
        # head's slice of the output projection: [bt*n, p] @ [p, d].
        oh = lax.dot_general(probs.astype(jnp.bfloat16), Vh,
                             (((2,), (1,)), ((0,), (0,))),
                             preferred_element_type=jnp.float32)
        oh2 = oh.reshape(bt * n, p).astype(jnp.bfloat16)
        acc_ref[...] += lax.dot_general(oh2, wo_ref[sl, :],
                                        (((1,), (0,)), ((), ())),
                                        preferred_element_type=jnp.float32)

    o_ref[...] = (acc_ref[...] + bo_ref[0]).astype(o_ref.dtype)


def _pick_batch_tile(b, n, target_rows=256):
    """Batch tile so the projection matmul M-dim (bt*n) reaches one MXU tile
    (256 on v6e/v7x; also fine for v5e's 128-wide MXU) while keeping the grid
    length >= 2 so v7x's two TensorCores both get work."""
    divs = [x for x in range(1, b + 1) if b % x == 0]
    cands = [x for x in divs if b // x >= 2] or divs
    big_enough = [x for x in cands if x * n >= target_rows]
    return min(big_enough) if big_enough else max(cands)


def multihead_attention(queries, keys, values, params, *, h,
                        approx_reciprocal=True):
    """queries: [b, n, d], keys/values: [b, m, d] -> [b, n, d]"""
    b, n, d = queries.shape
    _, m, _ = keys.shape
    assert d % h == 0
    p = d // h
    temperature = float(math.sqrt(p))

    bt = _pick_batch_tile(b, n)
    assert (bt * n) % 8 == 0 and (bt * m) % 8 == 0, \
        "block rows (bt*seq) must be sublane (8) aligned"

    wq, bq, wk, bk, wv, bv, wo, bo = params

    # Host-side layout prep (free): flatten sequences, cast MXU operands to
    # bf16 (halves DMA bytes and VMEM), transpose weights to [in, out], fold
    # 1/temperature into the query projection.
    q2 = queries.reshape(b * n, d).astype(jnp.bfloat16)
    k2 = keys.reshape(b * m, d).astype(jnp.bfloat16)
    v2 = values.reshape(b * m, d).astype(jnp.bfloat16)
    wq_t = (wq.T / temperature).astype(jnp.bfloat16)
    bq_s = (bq / temperature).astype(jnp.float32)
    wk_t = wk.T.astype(jnp.bfloat16)
    wv_t = wv.T.astype(jnp.bfloat16)
    wo_t = wo.T.astype(jnp.bfloat16)
    bk_f = bk.astype(jnp.float32)
    bv_f = bv.astype(jnp.float32)
    bo_f = bo.astype(jnp.float32)

    # Constant (grid-invariant) operands: single-buffer to save VMEM (v7x).
    weight_spec = pl.BlockSpec((d, d), lambda i: (0, 0),
                               pipeline_mode=pl.Buffered(1))
    bias_spec = pl.BlockSpec((1, d), lambda i: (0, 0),
                             pipeline_mode=pl.Buffered(1))

    kernel = partial(_mha_kernel, h=h, bt=bt, n=n, m=m, d=d,
                     approx_reciprocal=approx_reciprocal)

    out2 = pl.pallas_call(
        kernel,
        out_shape=jax.ShapeDtypeStruct((b * n, d), queries.dtype),
        grid_spec=pltpu.PrefetchScalarGridSpec(
            num_scalar_prefetch=0,
            grid=(b // bt,),
            in_specs=[
                pl.BlockSpec((bt * n, d), lambda i: (i, 0)),   # queries
                pl.BlockSpec((bt * m, d), lambda i: (i, 0)),   # keys
                pl.BlockSpec((bt * m, d), lambda i: (i, 0)),   # values
                weight_spec, bias_spec,                        # project_queries
                weight_spec, bias_spec,                        # project_keys
                weight_spec, bias_spec,                        # project_values
                weight_spec, bias_spec,                        # concatenation
            ],
            out_specs=pl.BlockSpec((bt * n, d), lambda i: (i, 0)),
            scratch_shapes=[pltpu.VMEM((bt * n, d), jnp.float32)],
        ),
        compiler_params=pltpu.CompilerParams(
            dimension_semantics=("parallel",)),
    )(q2, k2, v2, wq_t, bq_s, wk_t, bk_f, wv_t, bv_f, wo_t, bo_f)

    return out2.reshape(b, n, d)


def init_params(key, d):
    """4 nn.Linear(d, d) layers: xavier_normal_ weights, zero biases."""
    std = math.sqrt(2.0 / (d + d))   # xavier normal for a square layer
    ks = jax.random.split(key, 4)
    params = []
    for k in ks:
        w = jax.random.normal(k, (d, d), dtype=jnp.float32) * std   # [out, in]
        b = jnp.zeros((1, d), dtype=jnp.float32)
        params += [w, b]
    return tuple(params)


def reference(queries, keys, values, params, *, h):
    """Pure-JAX f32 reference mirroring the PyTorch forward (no masks)."""
    wq, bq, wk, bk, wv, bv, wo, bo = params
    b, n, d = queries.shape
    _, m, _ = keys.shape
    p = d // h
    Q = queries @ wq.T + bq[0]
    K = keys @ wk.T + bk[0]
    V = values @ wv.T + bv[0]
    Q = Q.reshape(b, n, h, p).transpose(2, 0, 1, 3).reshape(h * b, n, p)
    K = K.reshape(b, m, h, p).transpose(2, 0, 1, 3).reshape(h * b, m, p)
    V = V.reshape(b, m, h, p).transpose(2, 0, 1, 3).reshape(h * b, m, p)
    att = jnp.einsum('bnp,bmp->bnm', Q, K) / math.sqrt(p)
    att = jax.nn.softmax(att, axis=2)
    out = jnp.einsum('bnm,bmp->bnp', att, V)
    out = out.reshape(h, b, n, p).transpose(1, 2, 0, 3).reshape(b, n, d)
    return out @ wo.T + bo[0]


if __name__ == "__main__":
    b, n, m, d, h = 2, 8, 8, 32, 4

    key = jax.random.PRNGKey(0)
    kq, kk, kv, kp = jax.random.split(key, 4)
    queries = jax.random.normal(kq, (b, n, d), dtype=jnp.float32)
    keys = jax.random.normal(kk, (b, m, d), dtype=jnp.float32)
    values = jax.random.normal(kv, (b, m, d), dtype=jnp.float32)
    params = init_params(kp, d)

    out = multihead_attention(queries, keys, values, params, h=h)
    out = jax.block_until_ready(out)

    ref = reference(queries, keys, values, params, h=h)
    assert out.shape == (b, n, d)
    # Tolerance loosened for bf16 MXU operands (f32 accumulation) and the
    # approximate softmax reciprocal.
    assert jnp.allclose(out, ref, atol=5e-2, rtol=5e-2), "mismatch vs reference"

    print("KERNEL_OK")
</pallas_src>

<mosaic_0001>
module attributes {stable_mosaic.version = 11 : i64} {
  func.func @_mha_kernel(%arg0: i32, %arg1: memref<8x32xbf16, #tpu.memory_space<vmem>>, %arg2: memref<8x32xbf16, #tpu.memory_space<vmem>>, %arg3: memref<8x32xbf16, #tpu.memory_space<vmem>>, %arg4: memref<32x32xbf16, #tpu.memory_space<vmem>>, %arg5: memref<1x32xf32, #tpu.memory_space<vmem>>, %arg6: memref<32x32xbf16, #tpu.memory_space<vmem>>, %arg7: memref<1x32xf32, #tpu.memory_space<vmem>>, %arg8: memref<32x32xbf16, #tpu.memory_space<vmem>>, %arg9: memref<1x32xf32, #tpu.memory_space<vmem>>, %arg10: memref<32x32xbf16, #tpu.memory_space<vmem>>, %arg11: memref<1x32xf32, #tpu.memory_space<vmem>>, %arg12: memref<8x32xf32, #tpu.memory_space<vmem>>, %arg13: memref<8x32xf32, #tpu.memory_space<vmem>>) attributes {dimension_semantics = [#tpu.dimension_semantics<parallel>], iteration_bounds = array<i64: 2>, scalar_prefetch = 0 : i64, scratch_operands = 1 : i64, tpu.core_type = #tpu.core_type<tc>, window_params = [{transform_indices = @transform_0, window_bounds = array<i64: 8, 32>}, {transform_indices = @transform_1, window_bounds = array<i64: 8, 32>}, {transform_indices = @transform_2, window_bounds = array<i64: 8, 32>}, {pipeline_mode = #tpu.pipeline_mode<synchronous>, transform_indices = @transform_3, window_bounds = array<i64: 32, 32>}, {pipeline_mode = #tpu.pipeline_mode<synchronous>, transform_indices = @transform_4, window_bounds = array<i64: 1, 32>}, {pipeline_mode = #tpu.pipeline_mode<synchronous>, transform_indices = @transform_5, window_bounds = array<i64: 32, 32>}, {pipeline_mode = #tpu.pipeline_mode<synchronous>, transform_indices = @transform_6, window_bounds = array<i64: 1, 32>}, {pipeline_mode = #tpu.pipeline_mode<synchronous>, transform_indices = @transform_7, window_bounds = array<i64: 32, 32>}, {pipeline_mode = #tpu.pipeline_mode<synchronous>, transform_indices = @transform_8, window_bounds = array<i64: 1, 32>}, {pipeline_mode = #tpu.pipeline_mode<synchronous>, transform_indices = @transform_9, window_bounds = array<i64: 32, 32>}, {pipeline_mode = #tpu.pipeline_mode<synchronous>, transform_indices = @transform_10, window_bounds = array<i64: 1, 32>}, {transform_indices = @transform_11, window_bounds = array<i64: 8, 32>}]} {
    %c0 = arith.constant 0 : index
    %c0_0 = arith.constant 0 : index
    %0 = vector.load %arg1[%c0, %c0_0] : memref<8x32xbf16, #tpu.memory_space<vmem>>, vector<8x32xbf16>
    %c0_1 = arith.constant 0 : index
    %c0_2 = arith.constant 0 : index
    %1 = vector.load %arg4[%c0_1, %c0_2] : memref<32x32xbf16, #tpu.memory_space<vmem>>, vector<32x32xbf16>
    %cst = arith.constant dense<0.000000e+00> : vector<8x32xf32>
    %2 = tpu.matmul %0, %1, %cst {dimension_numbers = #tpu.dot_dimension_numbers<[1], [0], [0], [1], [0, 0, 1, 1], [], []>} : vector<8x32xbf16>, vector<32x32xbf16>, vector<8x32xf32> -> vector<8x32xf32>
    %c0_3 = arith.constant 0 : index
    %c0_4 = arith.constant 0 : index
    %3 = vector.load %arg5[%c0_3, %c0_4] : memref<1x32xf32, #tpu.memory_space<vmem>>, vector<1x32xf32>
    %4 = vector.shape_cast %3 : vector<1x32xf32> to vector<32xf32>
    %5 = vector.shape_cast %4 : vector<32xf32> to vector<1x32xf32>
    %6 = vector.broadcast %5 : vector<1x32xf32> to vector<8x32xf32>
    %7 = arith.addf %2, %6 : vector<8x32xf32>
    %8 = vector.shape_cast %7 : vector<8x32xf32> to vector<1x8x32xf32>
    %9 = arith.truncf %8 : vector<1x8x32xf32> to vector<1x8x32xbf16>
    %c0_5 = arith.constant 0 : index
    %c0_6 = arith.constant 0 : index
    %10 = vector.load %arg2[%c0_5, %c0_6] : memref<8x32xbf16, #tpu.memory_space<vmem>>, vector<8x32xbf16>
    %c0_7 = arith.constant 0 : index
    %c0_8 = arith.constant 0 : index
    %11 = vector.load %arg6[%c0_7, %c0_8] : memref<32x32xbf16, #tpu.memory_space<vmem>>, vector<32x32xbf16>
    %cst_9 = arith.constant dense<0.000000e+00> : vector<8x32xf32>
    %12 = tpu.matmul %10, %11, %cst_9 {dimension_numbers = #tpu.dot_dimension_numbers<[1], [0], [0], [1], [0, 0, 1, 1], [], []>} : vector<8x32xbf16>, vector<32x32xbf16>, vector<8x32xf32> -> vector<8x32xf32>
    %c0_10 = arith.constant 0 : index
    %c0_11 = arith.constant 0 : index
    %13 = vector.load %arg7[%c0_10, %c0_11] : memref<1x32xf32, #tpu.memory_space<vmem>>, vector<1x32xf32>
    %14 = vector.shape_cast %13 : vector<1x32xf32> to vector<32xf32>
    %15 = vector.shape_cast %14 : vector<32xf32> to vector<1x32xf32>
    %16 = vector.broadcast %15 : vector<1x32xf32> to vector<8x32xf32>
    %17 = arith.addf %12, %16 : vector<8x32xf32>
    %18 = vector.shape_cast %17 : vector<8x32xf32> to vector<1x8x32xf32>
    %19 = arith.truncf %18 : vector<1x8x32xf32> to vector<1x8x32xbf16>
    %c0_12 = arith.constant 0 : index
    %c0_13 = arith.constant 0 : index
    %20 = vector.load %arg3[%c0_12, %c0_13] : memref<8x32xbf16, #tpu.memory_space<vmem>>, vector<8x32xbf16>
    %c0_14 = arith.constant 0 : index
    %c0_15 = arith.constant 0 : index
    %21 = vector.load %arg8[%c0_14, %c0_15] : memref<32x32xbf16, #tpu.memory_space<vmem>>, vector<32x32xbf16>
    %cst_16 = arith.constant dense<0.000000e+00> : vector<8x32xf32>
    %22 = tpu.matmul %20, %21, %cst_16 {dimension_numbers = #tpu.dot_dimension_numbers<[1], [0], [0], [1], [0, 0, 1, 1], [], []>} : vector<8x32xbf16>, vector<32x32xbf16>, vector<8x32xf32> -> vector<8x32xf32>
    %c0_17 = arith.constant 0 : index
    %c0_18 = arith.constant 0 : index
    %23 = vector.load %arg9[%c0_17, %c0_18] : memref<1x32xf32, #tpu.memory_space<vmem>>, vector<1x32xf32>
    %24 = vector.shape_cast %23 : vector<1x32xf32> to vector<32xf32>
    %25 = vector.shape_cast %24 : vector<32xf32> to vector<1x32xf32>
    %26 = vector.broadcast %25 : vector<1x32xf32> to vector<8x32xf32>
    %27 = arith.addf %22, %26 : vector<8x32xf32>
    %28 = vector.shape_cast %27 : vector<8x32xf32> to vector<1x8x32xf32>
    %29 = arith.truncf %28 : vector<1x8x32xf32> to vector<1x8x32xbf16>
    %cst_19 = arith.constant 0.000000e+00 : f32
    %30 = vector.broadcast %cst_19 : f32 to vector<8x32xf32>
    %c0_20 = arith.constant 0 : index
    %c0_21 = arith.constant 0 : index
    %31 = vector.load %arg13[%c0_20, %c0_21] : memref<8x32xf32, #tpu.memory_space<vmem>>, vector<8x32xf32>
    tpu.vector_store %arg13[%c0_20, %c0_21], %30 {strides = array<i32>} : memref<8x32xf32, #tpu.memory_space<vmem>>, vector<8x32xf32>,
    %32 = vector.extract_strided_slice %9 {offsets = [0, 0, 0], sizes = [1, 8, 8], strides = [1, 1, 1]} : vector<1x8x32xbf16> to vector<1x8x8xbf16>
    %33 = vector.extract_strided_slice %19 {offsets = [0, 0, 0], sizes = [1, 8, 8], strides = [1, 1, 1]} : vector<1x8x32xbf16> to vector<1x8x8xbf16>
    %34 = vector.extract_strided_slice %29 {offsets = [0, 0, 0], sizes = [1, 8, 8], strides = [1, 1, 1]} : vector<1x8x32xbf16> to vector<1x8x8xbf16>
    %cst_22 = arith.constant dense<0.000000e+00> : vector<1x8x8xf32>
    %35 = tpu.matmul %32, %33, %cst_22 {dimension_numbers = #tpu.dot_dimension_numbers<[2], [2], [1], [1], [0, 0, 0, 1, 1, 1], [0], [0]>} : vector<1x8x8xbf16>, vector<1x8x8xbf16>, vector<1x8x8xf32> -> vector<1x8x8xf32>
    %cst_23 = arith.constant dense<0xFF800000> : vector<1x8xf32>
    %36 = vector.multi_reduction <maximumf>, %35, %cst_23 [2] : vector<1x8x8xf32> to vector<1x8xf32>
    %37 = vector.shape_cast %36 : vector<1x8xf32> to vector<1x8x1xf32>
    %38 = vector.broadcast %37 : vector<1x8x1xf32> to vector<1x8x8xf32>
    %39 = arith.subf %35, %38 : vector<1x8x8xf32>
    %40 = math.exp %39 : vector<1x8x8xf32>
    %cst_24 = arith.constant dense<0.000000e+00> : vector<1x8xf32>
    %41 = vector.multi_reduction <add>, %40, %cst_24 [2] : vector<1x8x8xf32> to vector<1x8xf32>
    %42 = vector.shape_cast %41 : vector<1x8xf32> to vector<1x8x1xf32>
    %43 = tpu.reciprocal %42 {approx = true} : vector<1x8x1xf32> -> vector<1x8x1xf32>
    %44 = vector.broadcast %43 : vector<1x8x1xf32> to vector<1x8x8xf32>
    %45 = arith.mulf %40, %44 : vector<1x8x8xf32>
    %46 = arith.truncf %45 : vector<1x8x8xf32> to vector<1x8x8xbf16>
    %cst_25 = arith.constant dense<0.000000e+00> : vector<1x8x8xf32>
    %47 = tpu.matmul %46, %34, %cst_25 {dimension_numbers = #tpu.dot_dimension_numbers<[2], [1], [1], [2], [0, 0, 0, 1, 1, 2], [0], [0]>} : vector<1x8x8xbf16>, vector<1x8x8xbf16>, vector<1x8x8xf32> -> vector<1x8x8xf32>
    %48 = vector.shape_cast %47 : vector<1x8x8xf32> to vector<8x8xf32>
    %49 = arith.truncf %48 : vector<8x8xf32> to vector<8x8xbf16>
    %c0_26 = arith.constant 0 : index
    %c0_27 = arith.constant 0 : index
    %50 = vector.load %arg13[%c0_26, %c0_27] : memref<8x32xf32, #tpu.memory_space<vmem>>, vector<8x32xf32>
    %c0_28 = arith.constant 0 : index
    %c0_29 = arith.constant 0 : index
    %51 = vector.load %arg10[%c0_28, %c0_29] : memref<32x32xbf16, #tpu.memory_space<vmem>>, vector<8x32xbf16>
    %cst_30 = arith.constant dense<0.000000e+00> : vector<8x32xf32>
    %52 = tpu.matmul %49, %51, %cst_30 {dimension_numbers = #tpu.dot_dimension_numbers<[1], [0], [0], [1], [0, 0, 1, 1], [], []>} : vector<8x8xbf16>, vector<8x32xbf16>, vector<8x32xf32> -> vector<8x32xf32>
    %53 = arith.addf %50, %52 : vector<8x32xf32>
    %c0_31 = arith.constant 0 : index
    %c0_32 = arith.constant 0 : index
    %54 = vector.load %arg13[%c0_31, %c0_32] : memref<8x32xf32, #tpu.memory_space<vmem>>, vector<8x32xf32>
    tpu.vector_store %arg13[%c0_31, %c0_32], %53 {strides = array<i32>} : memref<8x32xf32, #tpu.memory_space<vmem>>, vector<8x32xf32>,
    %55 = vector.extract_strided_slice %9 {offsets = [0, 0, 8], sizes = [1, 8, 8], strides = [1, 1, 1]} : vector<1x8x32xbf16> to vector<1x8x8xbf16>
    %56 = vector.extract_strided_slice %19 {offsets = [0, 0, 8], sizes = [1, 8, 8], strides = [1, 1, 1]} : vector<1x8x32xbf16> to vector<1x8x8xbf16>
    %57 = vector.extract_strided_slice %29 {offsets = [0, 0, 8], sizes = [1, 8, 8], strides = [1, 1, 1]} : vector<1x8x32xbf16> to vector<1x8x8xbf16>
    %cst_33 = arith.constant dense<0.000000e+00> : vector<1x8x8xf32>
    %58 = tpu.matmul %55, %56, %cst_33 {dimension_numbers = #tpu.dot_dimension_numbers<[2], [2], [1], [1], [0, 0, 0, 1, 1, 1], [0], [0]>} : vector<1x8x8xbf16>, vector<1x8x8xbf16>, vector<1x8x8xf32> -> vector<1x8x8xf32>
    %cst_34 = arith.constant dense<0xFF800000> : vector<1x8xf32>
    %59 = vector.multi_reduction <maximumf>, %58, %cst_34 [2] : vector<1x8x8xf32> to vector<1x8xf32>
    %60 = vector.shape_cast %59 : vector<1x8xf32> to vector<1x8x1xf32>
    %61 = vector.broadcast %60 : vector<1x8x1xf32> to vector<1x8x8xf32>
    %62 = arith.subf %58, %61 : vector<1x8x8xf32>
    %63 = math.exp %62 : vector<1x8x8xf32>
    %cst_35 = arith.constant dense<0.000000e+00> : vector<1x8xf32>
    %64 = vector.multi_reduction <add>, %63, %cst_35 [2] : vector<1x8x8xf32> to vector<1x8xf32>
    %65 = vector.shape_cast %64 : vector<1x8xf32> to vector<1x8x1xf32>
    %66 = tpu.reciprocal %65 {approx = true} : vector<1x8x1xf32> -> vector<1x8x1xf32>
    %67 = vector.broadcast %66 : vector<1x8x1xf32> to vector<1x8x8xf32>
    %68 = arith.mulf %63, %67 : vector<1x8x8xf32>
    %69 = arith.truncf %68 : vector<1x8x8xf32> to vector<1x8x8xbf16>
    %cst_36 = arith.constant dense<0.000000e+00> : vector<1x8x8xf32>
    %70 = tpu.matmul %69, %57, %cst_36 {dimension_numbers = #tpu.dot_dimension_numbers<[2], [1], [1], [2], [0, 0, 0, 1, 1, 2], [0], [0]>} : vector<1x8x8xbf16>, vector<1x8x8xbf16>, vector<1x8x8xf32> -> vector<1x8x8xf32>
    %71 = vector.shape_cast %70 : vector<1x8x8xf32> to vector<8x8xf32>
    %72 = arith.truncf %71 : vector<8x8xf32> to vector<8x8xbf16>
    %c0_37 = arith.constant 0 : index
    %c0_38 = arith.constant 0 : index
    %73 = vector.load %arg13[%c0_37, %c0_38] : memref<8x32xf32, #tpu.memory_space<vmem>>, vector<8x32xf32>
    %c8 = arith.constant 8 : index
    %c0_39 = arith.constant 0 : index
    %74 = vector.load %arg10[%c8, %c0_39] : memref<32x32xbf16, #tpu.memory_space<vmem>>, vector<8x32xbf16>
    %cst_40 = arith.constant dense<0.000000e+00> : vector<8x32xf32>
    %75 = tpu.matmul %72, %74, %cst_40 {dimension_numbers = #tpu.dot_dimension_numbers<[1], [0], [0], [1], [0, 0, 1, 1], [], []>} : vector<8x8xbf16>, vector<8x32xbf16>, vector<8x32xf32> -> vector<8x32xf32>
    %76 = arith.addf %73, %75 : vector<8x32xf32>
    %c0_41 = arith.constant 0 : index
    %c0_42 = arith.constant 0 : index
    %77 = vector.load %arg13[%c0_41, %c0_42] : memref<8x32xf32, #tpu.memory_space<vmem>>, vector<8x32xf32>
    tpu.vector_store %arg13[%c0_41, %c0_42], %76 {strides = array<i32>} : memref<8x32xf32, #tpu.memory_space<vmem>>, vector<8x32xf32>,
    %78 = vector.extract_strided_slice %9 {offsets = [0, 0, 16], sizes = [1, 8, 8], strides = [1, 1, 1]} : vector<1x8x32xbf16> to vector<1x8x8xbf16>
    %79 = vector.extract_strided_slice %19 {offsets = [0, 0, 16], sizes = [1, 8, 8], strides = [1, 1, 1]} : vector<1x8x32xbf16> to vector<1x8x8xbf16>
    %80 = vector.extract_strided_slice %29 {offsets = [0, 0, 16], sizes = [1, 8, 8], strides = [1, 1, 1]} : vector<1x8x32xbf16> to vector<1x8x8xbf16>
    %cst_43 = arith.constant dense<0.000000e+00> : vector<1x8x8xf32>
    %81 = tpu.matmul %78, %79, %cst_43 {dimension_numbers = #tpu.dot_dimension_numbers<[2], [2], [1], [1], [0, 0, 0, 1, 1, 1], [0], [0]>} : vector<1x8x8xbf16>, vector<1x8x8xbf16>, vector<1x8x8xf32> -> vector<1x8x8xf32>
    %cst_44 = arith.constant dense<0xFF800000> : vector<1x8xf32>
    %82 = vector.multi_reduction <maximumf>, %81, %cst_44 [2] : vector<1x8x8xf32> to vector<1x8xf32>
    %83 = vector.shape_cast %82 : vector<1x8xf32> to vector<1x8x1xf32>
    %84 = vector.broadcast %83 : vector<1x8x1xf32> to vector<1x8x8xf32>
    %85 = arith.subf %81, %84 : vector<1x8x8xf32>
    %86 = math.exp %85 : vector<1x8x8xf32>
    %cst_45 = arith.constant dense<0.000000e+00> : vector<1x8xf32>
    %87 = vector.multi_reduction <add>, %86, %cst_45 [2] : vector<1x8x8xf32> to vector<1x8xf32>
    %88 = vector.shape_cast %87 : vector<1x8xf32> to vector<1x8x1xf32>
    %89 = tpu.reciprocal %88 {approx = true} : vector<1x8x1xf32> -> vector<1x8x1xf32>
    %90 = vector.broadcast %89 : vector<1x8x1xf32> to vector<1x8x8xf32>
    %91 = arith.mulf %86, %90 : vector<1x8x8xf32>
    %92 = arith.truncf %91 : vector<1x8x8xf32> to vector<1x8x8xbf16>
    %cst_46 = arith.constant dense<0.000000e+00> : vector<1x8x8xf32>
    %93 = tpu.matmul %92, %80, %cst_46 {dimension_numbers = #tpu.dot_dimension_numbers<[2], [1], [1], [2], [0, 0, 0, 1, 1, 2], [0], [0]>} : vector<1x8x8xbf16>, vector<1x8x8xbf16>, vector<1x8x8xf32> -> vector<1x8x8xf32>
    %94 = vector.shape_cast %93 : vector<1x8x8xf32> to vector<8x8xf32>
    %95 = arith.truncf %94 : vector<8x8xf32> to vector<8x8xbf16>
    %c0_47 = arith.constant 0 : index
    %c0_48 = arith.constant 0 : index
    %96 = vector.load %arg13[%c0_47, %c0_48] : memref<8x32xf32, #tpu.memory_space<vmem>>, vector<8x32xf32>
    %c16 = arith.constant 16 : index
    %c0_49 = arith.constant 0 : index
    %97 = vector.load %arg10[%c16, %c0_49] : memref<32x32xbf16, #tpu.memory_space<vmem>>, vector<8x32xbf16>
    %cst_50 = arith.constant dense<0.000000e+00> : vector<8x32xf32>
    %98 = tpu.matmul %95, %97, %cst_50 {dimension_numbers = #tpu.dot_dimension_numbers<[1], [0], [0], [1], [0, 0, 1, 1], [], []>} : vector<8x8xbf16>, vector<8x32xbf16>, vector<8x32xf32> -> vector<8x32xf32>
    %99 = arith.addf %96, %98 : vector<8x32xf32>
    %c0_51 = arith.constant 0 : index
    %c0_52 = arith.constant 0 : index
    %100 = vector.load %arg13[%c0_51, %c0_52] : memref<8x32xf32, #tpu.memory_space<vmem>>, vector<8x32xf32>
    tpu.vector_store %arg13[%c0_51, %c0_52], %99 {strides = array<i32>} : memref<8x32xf32, #tpu.memory_space<vmem>>, vector<8x32xf32>,
    %101 = vector.extract_strided_slice %9 {offsets = [0, 0, 24], sizes = [1, 8, 8], strides = [1, 1, 1]} : vector<1x8x32xbf16> to vector<1x8x8xbf16>
    %102 = vector.extract_strided_slice %19 {offsets = [0, 0, 24], sizes = [1, 8, 8], strides = [1, 1, 1]} : vector<1x8x32xbf16> to vector<1x8x8xbf16>
    %103 = vector.extract_strided_slice %29 {offsets = [0, 0, 24], sizes = [1, 8, 8], strides = [1, 1, 1]} : vector<1x8x32xbf16> to vector<1x8x8xbf16>
    %cst_53 = arith.constant dense<0.000000e+00> : vector<1x8x8xf32>
    %104 = tpu.matmul %101, %102, %cst_53 {dimension_numbers = #tpu.dot_dimension_numbers<[2], [2], [1], [1], [0, 0, 0, 1, 1, 1], [0], [0]>} : vector<1x8x8xbf16>, vector<1x8x8xbf16>, vector<1x8x8xf32> -> vector<1x8x8xf32>
    %cst_54 = arith.constant dense<0xFF800000> : vector<1x8xf32>
    %105 = vector.multi_reduction <maximumf>, %104, %cst_54 [2] : vector<1x8x8xf32> to vector<1x8xf32>
    %106 = vector.shape_cast %105 : vector<1x8xf32> to vector<1x8x1xf32>
    %107 = vector.broadcast %106 : vector<1x8x1xf32> to vector<1x8x8xf32>
    %108 = arith.subf %104, %107 : vector<1x8x8xf32>
    %109 = math.exp %108 : vector<1x8x8xf32>
    %cst_55 = arith.constant dense<0.000000e+00> : vector<1x8xf32>
    %110 = vector.multi_reduction <add>, %109, %cst_55 [2] : vector<1x8x8xf32> to vector<1x8xf32>
    %111 = vector.shape_cast %110 : vector<1x8xf32> to vector<1x8x1xf32>
    %112 = tpu.reciprocal %111 {approx = true} : vector<1x8x1xf32> -> vector<1x8x1xf32>
    %113 = vector.broadcast %112 : vector<1x8x1xf32> to vector<1x8x8xf32>
    %114 = arith.mulf %109, %113 : vector<1x8x8xf32>
    %115 = arith.truncf %114 : vector<1x8x8xf32> to vector<1x8x8xbf16>
    %cst_56 = arith.constant dense<0.000000e+00> : vector<1x8x8xf32>
    %116 = tpu.matmul %115, %103, %cst_56 {dimension_numbers = #tpu.dot_dimension_numbers<[2], [1], [1], [2], [0, 0, 0, 1, 1, 2], [0], [0]>} : vector<1x8x8xbf16>, vector<1x8x8xbf16>, vector<1x8x8xf32> -> vector<1x8x8xf32>
    %117 = vector.shape_cast %116 : vector<1x8x8xf32> to vector<8x8xf32>
    %118 = arith.truncf %117 : vector<8x8xf32> to vector<8x8xbf16>
    %c0_57 = arith.constant 0 : index
    %c0_58 = arith.constant 0 : index
    %119 = vector.load %arg13[%c0_57, %c0_58] : memref<8x32xf32, #tpu.memory_space<vmem>>, vector<8x32xf32>
    %c24 = arith.constant 24 : index
    %c0_59 = arith.constant 0 : index
    %120 = vector.load %arg10[%c24, %c0_59] : memref<32x32xbf16, #tpu.memory_space<vmem>>, vector<8x32xbf16>
    %cst_60 = arith.constant dense<0.000000e+00> : vector<8x32xf32>
    %121 = tpu.matmul %118, %120, %cst_60 {dimension_numbers = #tpu.dot_dimension_numbers<[1], [0], [0], [1], [0, 0, 1, 1], [], []>} : vector<8x8xbf16>, vector<8x32xbf16>, vector<8x32xf32> -> vector<8x32xf32>
    %122 = arith.addf %119, %121 : vector<8x32xf32>
    %c0_61 = arith.constant 0 : index
    %c0_62 = arith.constant 0 : index
    %123 = vector.load %arg13[%c0_61, %c0_62] : memref<8x32xf32, #tpu.memory_space<vmem>>, vector<8x32xf32>
    tpu.vector_store %arg13[%c0_61, %c0_62], %122 {strides = array<i32>} : memref<8x32xf32, #tpu.memory_space<vmem>>, vector<8x32xf32>,
    %c0_63 = arith.constant 0 : index
    %c0_64 = arith.constant 0 : index
    %124 = vector.load %arg13[%c0_63, %c0_64] : memref<8x32xf32, #tpu.memory_space<vmem>>, vector<8x32xf32>
    %c0_65 = arith.constant 0 : index
    %c0_66 = arith.constant 0 : index
    %125 = vector.load %arg11[%c0_65, %c0_66] : memref<1x32xf32, #tpu.memory_space<vmem>>, vector<1x32xf32>
    %126 = vector.shape_cast %125 : vector<1x32xf32> to vector<32xf32>
    %127 = vector.shape_cast %126 : vector<32xf32> to vector<1x32xf32>
    %128 = vector.broadcast %127 : vector<1x32xf32> to vector<8x32xf32>
    %129 = arith.addf %124, %128 : vector<8x32xf32>
    %c0_67 = arith.constant 0 : index
    %c0_68 = arith.constant 0 : index
    %130 = vector.load %arg12[%c0_67, %c0_68] : memref<8x32xf32, #tpu.memory_space<vmem>>, vector<8x32xf32>
    tpu.vector_store %arg12[%c0_67, %c0_68], %129 {strides = array<i32>} : memref<8x32xf32, #tpu.memory_space<vmem>>, vector<8x32xf32>,
    return
  }
  func.func @transform_0(%arg0: i32) -> (i32, i32) {
    %c0_i32 = arith.constant 0 : i32
    %c0_i32_0 = arith.constant 0 : i32
    return %arg0, %c0_i32 : i32, i32
  }
  func.func @transform_1(%arg0: i32) -> (i32, i32) {
    %c0_i32 = arith.constant 0 : i32
    %c0_i32_0 = arith.constant 0 : i32
    return %arg0, %c0_i32 : i32, i32
  }
  func.func @transform_2(%arg0: i32) -> (i32, i32) {
    %c0_i32 = arith.constant 0 : i32
    %c0_i32_0 = arith.constant 0 : i32
    return %arg0, %c0_i32 : i32, i32
  }
  func.func @transform_3(%arg0: i32) -> (i32, i32) {
    %c0_i32 = arith.constant 0 : i32
    %c0_i32_0 = arith.constant 0 : i32
    %c0_i32_1 = arith.constant 0 : i32
    return %c0_i32, %c0_i32_0 : i32, i32
  }
  func.func @transform_4(%arg0: i32) -> (i32, i32) {
    %c0_i32 = arith.constant 0 : i32
    %c0_i32_0 = arith.constant 0 : i32
    %c0_i32_1 = arith.constant 0 : i32
    return %c0_i32, %c0_i32_0 : i32, i32
  }
  func.func @transform_5(%arg0: i32) -> (i32, i32) {
    %c0_i32 = arith.constant 0 : i32
    %c0_i32_0 = arith.constant 0 : i32
    %c0_i32_1 = arith.constant 0 : i32
    return %c0_i32, %c0_i32_0 : i32, i32
  }
  func.func @transform_6(%arg0: i32) -> (i32, i32) {
    %c0_i32 = arith.constant 0 : i32
    %c0_i32_0 = arith.constant 0 : i32
    %c0_i32_1 = arith.constant 0 : i32
    return %c0_i32, %c0_i32_0 : i32, i32
  }
  func.func @transform_7(%arg0: i32) -> (i32, i32) {
    %c0_i32 = arith.constant 0 : i32
    %c0_i32_0 = arith.constant 0 : i32
    %c0_i32_1 = arith.constant 0 : i32
    return %c0_i32, %c0_i32_0 : i32, i32
  }
  func.func @transform_8(%arg0: i32) -> (i32, i32) {
    %c0_i32 = arith.constant 0 : i32
    %c0_i32_0 = arith.constant 0 : i32
    %c0_i32_1 = arith.constant 0 : i32
    return %c0_i32, %c0_i32_0 : i32, i32
  }
  func.func @transform_9(%arg0: i32) -> (i32, i32) {
    %c0_i32 = arith.constant 0 : i32
    %c0_i32_0 = arith.constant 0 : i32
    %c0_i32_1 = arith.constant 0 : i32
    return %c0_i32, %c0_i32_0 : i32, i32
  }
  func.func @transform_10(%arg0: i32) -> (i32, i32) {
    %c0_i32 = arith.constant 0 : i32
    %c0_i32_0 = arith.constant 0 : i32
    %c0_i32_1 = arith.constant 0 : i32
    return %c0_i32, %c0_i32_0 : i32, i32
  }
  func.func @transform_11(%arg0: i32) -> (i32, i32) {
    %c0_i32 = arith.constant 0 : i32
    %c0_i32_0 = arith.constant 0 : i32
    return %arg0, %c0_i32 : i32, i32
  }
}

</mosaic_0001>

<llo_original>
// kernel: tpu_custom_call.1
$region0: #{tpu_custom_call.1}
  #allocation0 [shape = 'u32[]', space=smem, size = 0x4, offset = 0x4, fixed_abs, tag = 'smem constant byte address 0x4 - core index']
  #allocation1 [shape = 'u32[144,128]{1,0:T(1,128)}', space=vmem, size = 0x12000, scoped, tag = 'internal scratch']
  #allocation2 [shape = 'f32[8,32]{1,0:T(8,128)}', space=vmem, size = 0x1000, scoped, tag = 'scratch operand']
  %s0 = inlined_call_operand.hbm [shape: bf16[16,32], index: 0, kind: input, shape index: {}]
  %s1 = inlined_call_operand.hbm [shape: bf16[16,32], index: 1, kind: input, shape index: {}]
  %s2 = inlined_call_operand.hbm [shape: bf16[16,32], index: 2, kind: input, shape index: {}]
  %s3 = inlined_call_operand.hbm [shape: bf16[32,32], index: 3, kind: input, shape index: {}]
  %s4 = inlined_call_operand.vmem [shape: f32[1,32], index: 4, kind: input, shape index: {}]
  %s5 = inlined_call_operand.vmem [shape: bf16[32,32], index: 5, kind: input, shape index: {}]
  %s6 = inlined_call_operand.vmem [shape: f32[1,32], index: 6, kind: input, shape index: {}]
  %s7 = inlined_call_operand.hbm [shape: bf16[32,32], index: 7, kind: input, shape index: {}]
  %s8 = inlined_call_operand.hbm [shape: f32[1,32], index: 8, kind: input, shape index: {}]
  %s9 = inlined_call_operand.vmem [shape: bf16[32,32], index: 9, kind: input, shape index: {}]
  %s10 = inlined_call_operand.vmem [shape: f32[1,32], index: 10, kind: input, shape index: {}]
  %s11 = inlined_call_operand.hbm [shape: f32[16,32], index: 11, kind: output, shape index: {}]
  %s12 = sld [smem:[#allocation0]]
  $region101: #{tpu_custom_call.1} parent=0
    _
  %s14 = ssub.s32 1, %s12
  %s15 = scalar_select 0, %s14, %s12
  $region1: #{tpu_custom_call.1} parent=0
    #allocation3 [shape = 'u8[4096]{0}', space=vmem, size = 0x1000, scoped, tag = 'input window, operand 0']
    #allocation4 [shape = 's32[2]{0}', space=sflag, size = 0x8, scoped, tag = 'scoped memory for tpu_custom_call.1']
    #allocation5 [shape = 's32[2]{0}', space=sflag, size = 0x8, scoped, tag = 'scoped memory for tpu_custom_call.1']
    #allocation6 [shape = 'u8[4096]{0}', space=vmem, size = 0x1000, scoped, tag = 'input window, operand 1']
    #allocation7 [shape = 's32[2]{0}', space=sflag, size = 0x8, scoped, tag = 'scoped memory for tpu_custom_call.1']
    #allocation8 [shape = 'u8[4096]{0}', space=vmem, size = 0x1000, scoped, tag = 'input window, operand 2']
    #allocation9 [shape = 'u8[8192]{0}', space=vmem, size = 0x2000, scoped, tag = 'input window, operand 3, single buffered']
    #allocation10 [shape = 's32[1]{0}', space=sflag, size = 0x4, scoped, tag = 'scoped memory for tpu_custom_call.1']
    #allocation11 [shape = 'u8[8192]{0}', space=vmem, size = 0x2000, scoped, tag = 'input window, operand 7, single buffered']
    #allocation12 [shape = 'u8[512]{0}', space=vmem, size = 0x400, scoped, tag = 'input window, operand 8, single buffered']
    #allocation13 [shape = 's32[1]{0}', space=sflag, size = 0x4, scoped, tag = 'scoped memory for tpu_custom_call.1']
    #allocation14 [shape = 'u8[8192]{0}', space=vmem, size = 0x2000, scoped, tag = 'output window, operand 0']
    %16 = vsyncpa [#allocation4], 0
    %s17 = scalar_lea.sflag [#allocation4], 1
    %18 = vsyncpa %s17, 0
    %19 = vsyncpa [#allocation7], 0
    %s20 = scalar_lea.sflag [#allocation7], 1
    %21 = vsyncpa %s20, 0
    %22 = vsyncpa [#allocation10], 0
    %23 = vsyncpa [#allocation13], 0
    %24 = vsyncpa [#allocation5], 0
    %s25 = scalar_lea.sflag [#allocation5], 1
    %26 = vsyncpa %s25, 0
    loop: start=0, step=1, limit=4
    $region2: #{tpu_custom_call.1} parent=1 // loop_pre_header
      _
    $region3: #{tpu_custom_call.1} parent=1 // loop_header
      %s28 = sphi 0, %s32
      %p29 = scmp.ge.s32.totalorder %s28, 4
      %s38 = sphi 0, %s40
      %s41 = sphi 0, %s38
      %s42 = sphi 0, %s41
      %s58 = sphi 0, %s42
      %s64 = sphi 0, %s66
      %s67 = sphi 0, %s64
      %s68 = sphi 0, %s67
      %s84 = sphi 0, %s68
      %s90 = sphi 0, %s92
      %s93 = sphi 0, %s90
      %s94 = sphi 0, %s93
      %s110 = sphi 0, %s94
      %s114 = sphi 0, %s114
      %s116 = sphi 0, %s114
      %s117 = sphi 0, %s116
      %s131 = sphi 0, %s117
      %s135 = sphi 0, %s135
      %s137 = sphi 0, %s135
      %s138 = sphi 0, %s137
      %s152 = sphi 0, %s138
      %s156 = sphi 0, %s156
      %s158 = sphi 0, %s156
      %s159 = sphi 0, %s158
      %s173 = sphi 0, %s159
      %s177 = sphi 0, %s177
      %s179 = sphi 0, %s177
      %s180 = sphi 0, %s179
      %s194 = sphi 0, %s180
      %s198 = sphi 0, %s198
      %s200 = sphi 0, %s198
      %s201 = sphi 0, %s200
      %s215 = sphi 0, %s201
      %s219 = sphi 0, %s219
      %s221 = sphi 0, %s219
      %s222 = sphi 0, %s221
      %s236 = sphi 0, %s222
      %s240 = sphi 0, %s240
      %s242 = sphi 0, %s240
      %s243 = sphi 0, %s242
      %s257 = sphi 0, %s243
      %s261 = sphi 0, %s261
      %s263 = sphi 0, %s261
      %s264 = sphi 0, %s263
      %s278 = sphi 0, %s264
      %s284 = sphi 0, %s286
      %s287 = sphi 0, %s284
      %s288 = sphi 0, %s287
      %s304 = sphi 0, %s288
    $region4: #{tpu_custom_call.1} parent=1 // loop_header_branch
      %31 = sbr.rel (%p29) target = $region8
    $region5: #{tpu_custom_call.1} parent=1 // loop_body
      %s33 = ssub.s32 %s28, 1
      %s34 = ssub.s32 %s28, 2
      %s35 = sadd.s32 %s28, 1
      %s36 = ssub.s32 %s28, %s35
      %p37 = scmp.eq.s32.totalorder %s36, 0
      %s39 = sadd.s32 %s38, 1
      %s40 = scalar_select %p37, %s38, %s39
      %p43 = pneg %p37
      %p44 = scmp.eq.s32.totalorder %s28, 1
      %p45 = por %p43, %p44
      %p46 = scmp.ne.s32.totalorder %s38, %s41
      %p47 = scmp.eq.s32.totalorder %s28, 0
      %p48 = por %p46, %p47
      %p49 = scmp.ne.s32.totalorder %s38, %s41
      %p50 = scmp.eq.s32.totalorder %s33, 1
      %p51 = por %p49, %p50
      %p52 = scmp.ne.s32.totalorder %s41, %s42
      %p53 = scmp.eq.s32.totalorder %s33, 0
      %p54 = por %p52, %p53
      %p55 = scmp.ne.s32.totalorder %s41, %s42
      %p56 = scmp.eq.s32.totalorder %s34, 1
      %p57 = por %p55, %p56
      %p59 = scmp.ne.s32.totalorder %s42, %s58
      %p60 = scmp.eq.s32.totalorder %s34, 0
      %p61 = por %p59, %p60
      %s62 = ssub.s32 %s28, %s35
      %p63 = scmp.eq.s32.totalorder %s62, 0
      %s65 = sadd.s32 %s64, 1
      %s66 = scalar_select %p63, %s64, %s65
      %p69 = pneg %p63
      %p70 = scmp.eq.s32.totalorder %s28, 1
      %p71 = por %p69, %p70
      %p72 = scmp.ne.s32.totalorder %s64, %s67
      %p73 = scmp.eq.s32.totalorder %s28, 0
      %p74 = por %p72, %p73
      %p75 = scmp.ne.s32.totalorder %s64, %s67
      %p76 = scmp.eq.s32.totalorder %s33, 1
      %p77 = por %p75, %p76
      %p78 = scmp.ne.s32.totalorder %s67, %s68
      %p79 = scmp.eq.s32.totalorder %s33, 0
      %p80 = por %p78, %p79
      %p81 = scmp.ne.s32.totalorder %s67, %s68
      %p82 = scmp.eq.s32.totalorder %s34, 1
      %p83 = por %p81, %p82
      %p85 = scmp.ne.s32.totalorder %s68, %s84
      %p86 = scmp.eq.s32.totalorder %s34, 0
      %p87 = por %p85, %p86
      %s88 = ssub.s32 %s28, %s35
      %p89 = scmp.eq.s32.totalorder %s88, 0
      %s91 = sadd.s32 %s90, 1
      %s92 = scalar_select %p89, %s90, %s91
      %p95 = pneg %p89
      %p96 = scmp.eq.s32.totalorder %s28, 1
      %p97 = por %p95, %p96
      %p98 = scmp.ne.s32.totalorder %s90, %s93
      %p99 = scmp.eq.s32.totalorder %s28, 0
      %p100 = por %p98, %p99
      %p101 = scmp.ne.s32.totalorder %s90, %s93
      %p102 = scmp.eq.s32.totalorder %s33, 1
      %p103 = por %p101, %p102
      %p104 = scmp.ne.s32.totalorder %s93, %s94
      %p105 = scmp.eq.s32.totalorder %s33, 0
      %p106 = por %p104, %p105
      %p107 = scmp.ne.s32.totalorder %s93, %s94
      %p108 = scmp.eq.s32.totalorder %s34, 1
      %p109 = por %p107, %p108
      %p111 = scmp.ne.s32.totalorder %s94, %s110
      %p112 = scmp.eq.s32.totalorder %s34, 0
      %p113 = por %p111, %p112
      %s115 = sadd.s32 %s114, 1
      %p118 = scmp.eq.s32.totalorder %s28, 1
      %p119 = scmp.ne.s32.totalorder %s114, %s116
      %p120 = scmp.eq.s32.totalorder %s28, 0
      %p121 = por %p119, %p120
      %p122 = scmp.ne.s32.totalorder %s114, %s116
      %p123 = scmp.eq.s32.totalorder %s33, 1
      %p124 = por %p122, %p123
      %p125 = scmp.ne.s32.totalorder %s116, %s117
      %p126 = scmp.eq.s32.totalorder %s33, 0
      %p127 = por %p125, %p126
      %p128 = scmp.ne.s32.totalorder %s116, %s117
      %p129 = scmp.eq.s32.totalorder %s34, 1
      %p130 = por %p128, %p129
      %p132 = scmp.ne.s32.totalorder %s117, %s131
      %p133 = scmp.eq.s32.totalorder %s34, 0
      %p134 = por %p132, %p133
      %s136 = sadd.s32 %s135, 1
      %p139 = scmp.eq.s32.totalorder %s28, 1
      %p140 = scmp.ne.s32.totalorder %s135, %s137
      %p141 = scmp.eq.s32.totalorder %s28, 0
      %p142 = por %p140, %p141
      %p143 = scmp.ne.s32.totalorder %s135, %s137
      %p144 = scmp.eq.s32.totalorder %s33, 1
      %p145 = por %p143, %p144
      %p146 = scmp.ne.s32.totalorder %s137, %s138
      %p147 = scmp.eq.s32.totalorder %s33, 0
      %p148 = por %p146, %p147
      %p149 = scmp.ne.s32.totalorder %s137, %s138
      %p150 = scmp.eq.s32.totalorder %s34, 1
      %p151 = por %p149, %p150
      %p153 = scmp.ne.s32.totalorder %s138, %s152
      %p154 = scmp.eq.s32.totalorder %s34, 0
      %p155 = por %p153, %p154
      %s157 = sadd.s32 %s156, 1
      %p160 = scmp.eq.s32.totalorder %s28, 1
      %p161 = scmp.ne.s32.totalorder %s156, %s158
      %p162 = scmp.eq.s32.totalorder %s28, 0
      %p163 = por %p161, %p162
      %p164 = scmp.ne.s32.totalorder %s156, %s158
      %p165 = scmp.eq.s32.totalorder %s33, 1
      %p166 = por %p164, %p165
      %p167 = scmp.ne.s32.totalorder %s158, %s159
      %p168 = scmp.eq.s32.totalorder %s33, 0
      %p169 = por %p167, %p168
      %p170 = scmp.ne.s32.totalorder %s158, %s159
      %p171 = scmp.eq.s32.totalorder %s34, 1
      %p172 = por %p170, %p171
      %p174 = scmp.ne.s32.totalorder %s159, %s173
      %p175 = scmp.eq.s32.totalorder %s34, 0
      %p176 = por %p174, %p175
      %s178 = sadd.s32 %s177, 1
      %p181 = scmp.eq.s32.totalorder %s28, 1
      %p182 = scmp.ne.s32.totalorder %s177, %s179
      %p183 = scmp.eq.s32.totalorder %s28, 0
      %p184 = por %p182, %p183
      %p185 = scmp.ne.s32.totalorder %s177, %s179
      %p186 = scmp.eq.s32.totalorder %s33, 1
      %p187 = por %p185, %p186
      %p188 = scmp.ne.s32.totalorder %s179, %s180
      %p189 = scmp.eq.s32.totalorder %s33, 0
      %p190 = por %p188, %p189
      %p191 = scmp.ne.s32.totalorder %s179, %s180
      %p192 = scmp.eq.s32.totalorder %s34, 1
      %p193 = por %p191, %p192
      %p195 = scmp.ne.s32.totalorder %s180, %s194
      %p196 = scmp.eq.s32.totalorder %s34, 0
      %p197 = por %p195, %p196
      %s199 = sadd.s32 %s198, 1
      %p202 = scmp.eq.s32.totalorder %s28, 1
      %p203 = scmp.ne.s32.totalorder %s198, %s200
      %p204 = scmp.eq.s32.totalorder %s28, 0
      %p205 = por %p203, %p204
      %p206 = scmp.ne.s32.totalorder %s198, %s200
      %p207 = scmp.eq.s32.totalorder %s33, 1
      %p208 = por %p206, %p207
      %p209 = scmp.ne.s32.totalorder %s200, %s201
      %p210 = scmp.eq.s32.totalorder %s33, 0
      %p211 = por %p209, %p210
      %p212 = scmp.ne.s32.totalorder %s200, %s201
      %p213 = scmp.eq.s32.totalorder %s34, 1
      %p214 = por %p212, %p213
      %p216 = scmp.ne.s32.totalorder %s201, %s215
      %p217 = scmp.eq.s32.totalorder %s34, 0
      %p218 = por %p216, %p217
      %s220 = sadd.s32 %s219, 1
      %p223 = scmp.eq.s32.totalorder %s28, 1
      %p224 = scmp.ne.s32.totalorder %s219, %s221
      %p225 = scmp.eq.s32.totalorder %s28, 0
      %p226 = por %p224, %p225
      %p227 = scmp.ne.s32.totalorder %s219, %s221
      %p228 = scmp.eq.s32.totalorder %s33, 1
      %p229 = por %p227, %p228
      %p230 = scmp.ne.s32.totalorder %s221, %s222
      %p231 = scmp.eq.s32.totalorder %s33, 0
      %p232 = por %p230, %p231
      %p233 = scmp.ne.s32.totalorder %s221, %s222
      %p234 = scmp.eq.s32.totalorder %s34, 1
      %p235 = por %p233, %p234
      %p237 = scmp.ne.s32.totalorder %s222, %s236
      %p238 = scmp.eq.s32.totalorder %s34, 0
      %p239 = por %p237, %p238
      %s241 = sadd.s32 %s240, 1
      %p244 = scmp.eq.s32.totalorder %s28, 1
      %p245 = scmp.ne.s32.totalorder %s240, %s242
      %p246 = scmp.eq.s32.totalorder %s28, 0
      %p247 = por %p245, %p246
      %p248 = scmp.ne.s32.totalorder %s240, %s242
      %p249 = scmp.eq.s32.totalorder %s33, 1
      %p250 = por %p248, %p249
      %p251 = scmp.ne.s32.totalorder %s242, %s243
      %p252 = scmp.eq.s32.totalorder %s33, 0
      %p253 = por %p251, %p252
      %p254 = scmp.ne.s32.totalorder %s242, %s243
      %p255 = scmp.eq.s32.totalorder %s34, 1
      %p256 = por %p254, %p255
      %p258 = scmp.ne.s32.totalorder %s243, %s257
      %p259 = scmp.eq.s32.totalorder %s34, 0
      %p260 = por %p258, %p259
      %s262 = sadd.s32 %s261, 1
      %p265 = scmp.eq.s32.totalorder %s28, 1
      %p266 = scmp.ne.s32.totalorder %s261, %s263
      %p267 = scmp.eq.s32.totalorder %s28, 0
      %p268 = por %p266, %p267
      %p269 = scmp.ne.s32.totalorder %s261, %s263
      %p270 = scmp.eq.s32.totalorder %s33, 1
      %p271 = por %p269, %p270
      %p272 = scmp.ne.s32.totalorder %s263, %s264
      %p273 = scmp.eq.s32.totalorder %s33, 0
      %p274 = por %p272, %p273
      %p275 = scmp.ne.s32.totalorder %s263, %s264
      %p276 = scmp.eq.s32.totalorder %s34, 1
      %p277 = por %p275, %p276
      %p279 = scmp.ne.s32.totalorder %s264, %s278
      %p280 = scmp.eq.s32.totalorder %s34, 0
      %p281 = por %p279, %p280
      %s282 = ssub.s32 %s28, %s35
      %p283 = scmp.eq.s32.totalorder %s282, 0
      %s285 = sadd.s32 %s284, 1
      %s286 = scalar_select %p283, %s284, %s285
      %p289 = pneg %p283
      %p290 = scmp.eq.s32.totalorder %s28, 1
      %p291 = por %p289, %p290
      %p292 = scmp.ne.s32.totalorder %s284, %s287
      %p293 = scmp.eq.s32.totalorder %s28, 0
      %p294 = por %p292, %p293
      %p295 = scmp.ne.s32.totalorder %s284, %s287
      %p296 = scmp.eq.s32.totalorder %s33, 1
      %p297 = por %p295, %p296
      %p298 = scmp.ne.s32.totalorder %s287, %s288
      %p299 = scmp.eq.s32.totalorder %s33, 0
      %p300 = por %p298, %p299
      %p301 = scmp.ne.s32.totalorder %s287, %s288
      %p302 = scmp.eq.s32.totalorder %s34, 1
      %p303 = por %p301, %p302
      %p305 = scmp.ne.s32.totalorder %s288, %s304
      %p306 = scmp.eq.s32.totalorder %s34, 0
      %p307 = por %p305, %p306
      %p308 = scmp.le.s32.totalorder 1, %s28
      %p309 = scmp.lt.s32.totalorder %s28, 3
      %p310 = pnand %p308, %p309
      %p311 = pneg %p310
      // Predicated region
      $region9: #{tpu_custom_call.1} parent=5 // pred_check
        _
      $region10: #{tpu_custom_call.1} parent=5 // pred_check_branch
        %313 = sbr.rel (%p310) target = $region12
      $region11: #{tpu_custom_call.1} parent=5 // pred_region
        %s314 = ssub.s32 %s28, 1
        // Predicated region
        $region13: #{tpu_custom_call.1} parent=11 // pred_check
          %p315 = pneg %p127
        $region14: #{tpu_custom_call.1} parent=11 // pred_check_branch
          %317 = sbr.rel (%p315) target = $region16
        $region15: #{tpu_custom_call.1} parent=11 // pred_region
          %s319 = ssub.s32 256, 256
          %320 = vsyncadd [#allocation10], %s319
          %s321 = sshll.u32 [#allocation9], 4
          %s322 = int_to_ptr.vmem [resolvable:$true] %s321
          %327 = dma.hbm_to_vmem [thread:$0]  %s3, 256, %s322, [#allocation10], 64, 64, 4
        $region16: #{tpu_custom_call.1} parent=11 // pred_fallthru
          _
        // Predicated region
        $region17: #{tpu_custom_call.1} parent=11 // pred_check
          %p328 = pneg %p148
        $region18: #{tpu_custom_call.1} parent=11 // pred_check_branch
          %330 = sbr.rel (%p328) target = $region20
        $region19: #{tpu_custom_call.1} parent=11 // pred_region
          _
        $region20: #{tpu_custom_call.1} parent=11 // pred_fallthru
          _
        // Predicated region
        $region21: #{tpu_custom_call.1} parent=11 // pred_check
          %p331 = pneg %p169
        $region22: #{tpu_custom_call.1} parent=11 // pred_check_branch
          %333 = sbr.rel (%p331) target = $region24
        $region23: #{tpu_custom_call.1} parent=11 // pred_region
          _
        $region24: #{tpu_custom_call.1} parent=11 // pred_fallthru
          _
        // Predicated region
        $region25: #{tpu_custom_call.1} parent=11 // pred_check
          %p334 = pneg %p190
        $region26: #{tpu_custom_call.1} parent=11 // pred_check_branch
          %336 = sbr.rel (%p334) target = $region28
        $region27: #{tpu_custom_call.1} parent=11 // pred_region
          _
        $region28: #{tpu_custom_call.1} parent=11 // pred_fallthru
          _
        // Predicated region
        $region29: #{tpu_custom_call.1} parent=11 // pred_check
          %p337 = pneg %p211
        $region30: #{tpu_custom_call.1} parent=11 // pred_check_branch
          %339 = sbr.rel (%p337) target = $region32
        $region31: #{tpu_custom_call.1} parent=11 // pred_region
          %s341 = ssub.s32 256, 256
          %342 = vsyncadd [#allocation10], %s341
          %s343 = sshll.u32 [#allocation11], 4
          %s344 = int_to_ptr.vmem [resolvable:$true] %s343
          %349 = dma.hbm_to_vmem [thread:$0]  %s7, 256, %s344, [#allocation10], 64, 64, 4
        $region32: #{tpu_custom_call.1} parent=11 // pred_fallthru
          _
        // Predicated region
        $region33: #{tpu_custom_call.1} parent=11 // pred_check
          %p350 = pneg %p232
        $region34: #{tpu_custom_call.1} parent=11 // pred_check_branch
          %352 = sbr.rel (%p350) target = $region36
        $region35: #{tpu_custom_call.1} parent=11 // pred_region
          %s354 = ssub.s32 16, 16
          %355 = vsyncadd [#allocation13], %s354
          %s357 = sshll.u32 [#allocation12], 4
          %s358 = int_to_ptr.vmem [resolvable:$true] %s357
          %360 = dma.hbm_to_vmem [thread:$0]  %s8, 16, %s358, [#allocation13]
        $region36: #{tpu_custom_call.1} parent=11 // pred_fallthru
          _
        // Predicated region
        $region37: #{tpu_custom_call.1} parent=11 // pred_check
          %p361 = pneg %p253
        $region38: #{tpu_custom_call.1} parent=11 // pred_check_branch
          %363 = sbr.rel (%p361) target = $region40
        $region39: #{tpu_custom_call.1} parent=11 // pred_region
          _
        $region40: #{tpu_custom_call.1} parent=11 // pred_fallthru
          _
        // Predicated region
        $region41: #{tpu_custom_call.1} parent=11 // pred_check
          %p364 = pneg %p274
        $region42: #{tpu_custom_call.1} parent=11 // pred_check_branch
          %366 = sbr.rel (%p364) target = $region44
        $region43: #{tpu_custom_call.1} parent=11 // pred_region
          _
        $region44: #{tpu_custom_call.1} parent=11 // pred_fallthru
          _
      $region12: #{tpu_custom_call.1} parent=5 // pred_fallthru
        _
      %p367 = scmp.lt.s32.totalorder %s28, 2
      // Predicated region
      $region45: #{tpu_custom_call.1} parent=5 // pred_check
        %p368 = pneg %p367
      $region46: #{tpu_custom_call.1} parent=5 // pred_check_branch
        %370 = sbr.rel (%p368) target = $region48
      $region47: #{tpu_custom_call.1} parent=5 // pred_region
        // Predicated region
        $region49: #{tpu_custom_call.1} parent=47 // pred_check
          %p371 = pneg %p48
        $region50: #{tpu_custom_call.1} parent=47 // pred_check_branch
          %373 = sbr.rel (%p371) target = $region52
        $region51: #{tpu_custom_call.1} parent=47 // pred_region
          %s374 = sand.u32 %s38, 1
          %s375 = scalar_lea.sflag [#allocation4], %s374
          %s376 = sand.u32 %s38, 1
          %s377 = smul.addr %s376, 4
          %s378 = scalar_lea.vmem [#allocation3], %s377
          %s380 = ssub.s32 64, 64
          %381 = vsyncadd %s375, %s380
          %s382 = smul.addr %s28, 64
          %s383 = scalar_lea.hbm %s0, %s382
          %s385 = sshll.u32 %s378, 4
          %s386 = int_to_ptr.vmem [resolvable:$true] %s385
          %388 = dma.hbm_to_vmem [thread:$0]  %s383, 64, %s386, %s375
        $region52: #{tpu_custom_call.1} parent=47 // pred_fallthru
          _
        // Predicated region
        $region53: #{tpu_custom_call.1} parent=47 // pred_check
          %p389 = pneg %p74
        $region54: #{tpu_custom_call.1} parent=47 // pred_check_branch
          %391 = sbr.rel (%p389) target = $region56
        $region55: #{tpu_custom_call.1} parent=47 // pred_region
          %s392 = sand.u32 %s28, 1
          %s393 = scalar_lea.sflag [#allocation7], %s392
          %s394 = sand.u32 %s64, 1
          %s395 = smul.addr %s394, 4
          %s396 = scalar_lea.vmem [#allocation6], %s395
          %s398 = ssub.s32 64, 64
          %399 = vsyncadd %s393, %s398
          %s400 = smul.addr %s28, 64
          %s401 = scalar_lea.hbm %s1, %s400
          %s403 = sshll.u32 %s396, 4
          %s404 = int_to_ptr.vmem [resolvable:$true] %s403
          %406 = dma.hbm_to_vmem [thread:$0]  %s401, 64, %s404, %s393
        $region56: #{tpu_custom_call.1} parent=47 // pred_fallthru
          _
        // Predicated region
        $region57: #{tpu_custom_call.1} parent=47 // pred_check
          %p407 = pneg %p100
        $region58: #{tpu_custom_call.1} parent=47 // pred_check_branch
          %409 = sbr.rel (%p407) target = $region60
        $region59: #{tpu_custom_call.1} parent=47 // pred_region
          %s410 = sand.u32 %s28, 1
          %s411 = scalar_lea.sflag [#allocation7], %s410
          %s412 = sand.u32 %s90, 1
          %s413 = smul.addr %s412, 4
          %s414 = scalar_lea.vmem [#allocation8], %s413
          %s416 = ssub.s32 64, 64
          %417 = vsyncadd %s411, %s416
          %s418 = smul.addr %s28, 64
          %s419 = scalar_lea.hbm %s2, %s418
          %s421 = sshll.u32 %s414, 4
          %s422 = int_to_ptr.vmem [resolvable:$true] %s421
          %424 = dma.hbm_to_vmem [thread:$0]  %s419, 64, %s422, %s411
        $region60: #{tpu_custom_call.1} parent=47 // pred_fallthru
          _
      $region48: #{tpu_custom_call.1} parent=5 // pred_fallthru
        _
      %p425 = scmp.le.s32.totalorder 1, %s28
      %p426 = scmp.lt.s32.totalorder %s28, 3
      %p427 = pnand %p425, %p426
      %p428 = pneg %p427
      // Predicated region
      $region61: #{tpu_custom_call.1} parent=5 // pred_check
        _
      $region62: #{tpu_custom_call.1} parent=5 // pred_check_branch
        %430 = sbr.rel (%p427) target = $region64
      $region63: #{tpu_custom_call.1} parent=5 // pred_region
        %s431 = ssub.s32 %s28, 1
        %s432 = sand.u32 %s41, 1
        %s433 = scalar_lea.sflag [#allocation4], %s432
        %s434 = sand.u32 %s41, 1
        %s435 = smul.addr %s434, 4
        %s436 = scalar_lea.vmem [#allocation3], %s435
        // Predicated region
        $region65: #{tpu_custom_call.1} parent=63 // pred_check
          %p437 = pneg %p54
        $region66: #{tpu_custom_call.1} parent=63 // pred_check_branch
          %439 = sbr.rel (%p437) target = $region68
        $region67: #{tpu_custom_call.1} parent=63 // pred_region
          %440 = dma.done %s433, 64
        $region68: #{tpu_custom_call.1} parent=63 // pred_fallthru
          _
        %s441 = sand.u32 %s33, 1
        %s442 = scalar_lea.sflag [#allocation7], %s441
        %s443 = sand.u32 %s67, 1
        %s444 = smul.addr %s443, 4
        %s445 = scalar_lea.vmem [#allocation6], %s444
        // Predicated region
        $region69: #{tpu_custom_call.1} parent=63 // pred_check
          %p446 = pneg %p80
        $region70: #{tpu_custom_call.1} parent=63 // pred_check_branch
          %448 = sbr.rel (%p446) target = $region72
        $region71: #{tpu_custom_call.1} parent=63 // pred_region
          %449 = dma.done %s442, 64
        $region72: #{tpu_custom_call.1} parent=63 // pred_fallthru
          _
        %s450 = sand.u32 %s33, 1
        %s451 = scalar_lea.sflag [#allocation7], %s450
        %s452 = sand.u32 %s93, 1
        %s453 = smul.addr %s452, 4
        %s454 = scalar_lea.vmem [#allocation8], %s453
        // Predicated region
        $region73: #{tpu_custom_call.1} parent=63 // pred_check
          %p455 = pneg %p106
        $region74: #{tpu_custom_call.1} parent=63 // pred_check_branch
          %457 = sbr.rel (%p455) target = $region76
        $region75: #{tpu_custom_call.1} parent=63 // pred_region
          %458 = dma.done %s451, 64
        $region76: #{tpu_custom_call.1} parent=63 // pred_fallthru
          _
        // Predicated region
        $region77: #{tpu_custom_call.1} parent=63 // pred_check
          %p459 = pneg %p127
        $region78: #{tpu_custom_call.1} parent=63 // pred_check_branch
          %461 = sbr.rel (%p459) target = $region80
        $region79: #{tpu_custom_call.1} parent=63 // pred_region
          %462 = dma.done [#allocation10], 256
        $region80: #{tpu_custom_call.1} parent=63 // pred_fallthru
          _
        // Predicated region
        $region81: #{tpu_custom_call.1} parent=63 // pred_check
          %p463 = pneg %p211
        $region82: #{tpu_custom_call.1} parent=63 // pred_check_branch
          %465 = sbr.rel (%p463) target = $region84
        $region83: #{tpu_custom_call.1} parent=63 // pred_region
          %466 = dma.done [#allocation10], 256
        $region84: #{tpu_custom_call.1} parent=63 // pred_fallthru
          _
        // Predicated region
        $region85: #{tpu_custom_call.1} parent=63 // pred_check
          %p467 = pneg %p232
        $region86: #{tpu_custom_call.1} parent=63 // pred_check_branch
          %469 = sbr.rel (%p467) target = $region88
        $region87: #{tpu_custom_call.1} parent=63 // pred_region
          %470 = dma.done [#allocation13], 16
        $region88: #{tpu_custom_call.1} parent=63 // pred_fallthru
          _
        %s471 = sand.u32 %s41, 1
        %s472 = scalar_lea.sflag [#allocation4], %s471
        %s473 = sand.u32 %s41, 1
        %s474 = smul.addr %s473, 4
        %s475 = scalar_lea.vmem [#allocation3], %s474
        %p476 = pneg %p54
        %p477 = pneg %p51
        %s478 = sand.u32 %s33, 1
        %s479 = scalar_lea.sflag [#allocation7], %s478
        %s480 = sand.u32 %s67, 1
        %s481 = smul.addr %s480, 4
        %s482 = scalar_lea.vmem [#allocation6], %s481
        %p483 = pneg %p80
        %p484 = pneg %p77
        %s485 = sand.u32 %s33, 1
        %s486 = scalar_lea.sflag [#allocation7], %s485
        %s487 = sand.u32 %s93, 1
        %s488 = smul.addr %s487, 4
        %s489 = scalar_lea.vmem [#allocation8], %s488
        %p490 = pneg %p106
        %p491 = pneg %p103
        %p492 = pneg %p127
        %p493 = pneg %p124
        %p494 = pneg %p148
        %p495 = pneg %p145
        %p496 = pneg %p169
        %p497 = pneg %p166
        %p498 = pneg %p190
        %p499 = pneg %p187
        %p500 = pneg %p211
        %p501 = pneg %p208
        %p502 = pneg %p232
        %p503 = pneg %p229
        %p504 = pneg %p253
        %p505 = pneg %p250
        %p506 = pneg %p274
        %p507 = pneg %p271
        %p508 = pneg %p300
        %p509 = pneg %p297
        %s510 = sand.u32 %s287, 1
        %s511 = scalar_lea.sflag [#allocation5], %s510
        %s512 = sand.u32 %s287, 1
        %s513 = smul.addr %s512, 8
        %s514 = scalar_lea.vmem [#allocation14], %s513
        %v516 = vld [vmem:[%s436] sm:$0xf]
        %v517 = vld [vmem:[#allocation9] sm:$0xf]
        %v518 = vld [vmem:[#allocation9 + $0x4] sm:$0xf]
        %v519 = vld [vmem:[#allocation9 + $0x8] sm:$0xf]
        %v520 = vld [vmem:[#allocation9 + $0xc] sm:$0xf]
        %v521 = vld [vmem:[%s4] sm:$0x1]
        %v523 = vlaneseq
        %v524 = vshrl.u32 %v523, 7
        %v525 = vsub.s32 0, %v524
        %v526 = vrot.slane %v521, %v525
        %v532 = vunpack.c.l.b16 %v517
        %v533 = vunpack.c.l.b16 %v518
        %v534 = vunpack.c.l.b16 %v519
        %v535 = vunpack.c.l.b16 %v520
        %v536 = vpack.c.b16 %v533, %v532
        %v537 = vpack.c.b16 %v535, %v534
        %vm540 = vcmask 261120
        %v542 = vsel %vm540, %v516, 0
        %544 = vmatprep.subr.bf16.mxu0 0
        %545 = vmatpush1.bf16.msra.mxu0 %v536
        %546 = vmatprep.subr.bf16.mxu0 0
        %547 = vmatpush1.bf16.msra.mxu0 %v537
        %548 = vmatprep.subr.bf16.mxu0 0
        %549 = vmatpush1.bf16.msra.mxu0 0
        %550 = vmatprep.subr.bf16.mxu0 0
        %551 = vmatpush1.bf16.msra.mxu0 0
        %552 = vmatprep.subr.bf16.mxu0 0
        %553 = vmatpush1.bf16.msra.mxu0 0
        %554 = vmatprep.subr.bf16.mxu0 0
        %555 = vmatpush1.bf16.msra.mxu0 0
        %556 = vmatprep.subr.bf16.mxu0 0
        %557 = vmatpush1.bf16.msra.mxu0 0
        %558 = vmatprep.subr.bf16.mxu0 0
        %559 = vmatpush1.bf16.msra.mxu0 0
        %560 = vmatprep.subr.bf16.mxu0 0
        %561 = vmatpush1.bf16.msra.mxu0 0
        %562 = vmatprep.subr.bf16.mxu0 0
        %563 = vmatpush1.bf16.msra.mxu0 0
        %564 = vmatprep.subr.bf16.mxu0 0
        %565 = vmatpush1.bf16.msra.mxu0 0
        %566 = vmatprep.subr.bf16.mxu0 0
        %567 = vmatpush1.bf16.msra.mxu0 0
        %568 = vmatprep.subr.bf16.mxu0 0
        %569 = vmatpush1.bf16.msra.mxu0 0
        %570 = vmatprep.subr.bf16.mxu0 0
        %571 = vmatpush1.bf16.msra.mxu0 0
        %572 = vmatprep.subr.bf16.mxu0 0
        %573 = vmatpush1.bf16.msra.mxu0 0
        %574 = vmatprep.subr.bf16.mxu0 0
        %575 = vmatpush1.bf16.msra.mxu0 0
        %576 = vmatprep.mubr.bf16.mxu0 0
        %577 = vmatmul.mubr.bf16.gmra.mrb[0].mxu0 %v542
        %v578 = vpop.f32.mrb[0].mxu0
        %v579 = vadd.f32 %v526, %v578
        %v580 = vpop.f32.mrb[0].mxu0
        %v581 = vpop.f32.mrb[0].mxu0
        %v582 = vpop.f32.mrb[0].mxu0
        %583 = vdwg.mxu0
        %v584 = vpack.c.bf16 %v579, %v579
        %v585 = vld [vmem:[%s445] sm:$0xf]
        %v586 = vld [vmem:[%s5] sm:$0xf]
        %v587 = vld [vmem:[%s5 + $0x4] sm:$0xf]
        %v588 = vld [vmem:[%s5 + $0x8] sm:$0xf]
        %v589 = vld [vmem:[%s5 + $0xc] sm:$0xf]
        %v590 = vld [vmem:[%s6] sm:$0x1]
        %v592 = vlaneseq
        %v593 = vshrl.u32 %v592, 7
        %v594 = vsub.s32 0, %v593
        %v595 = vrot.slane %v590, %v594
        %v601 = vunpack.c.l.b16 %v586
        %v602 = vunpack.c.l.b16 %v587
        %v603 = vunpack.c.l.b16 %v588
        %v604 = vunpack.c.l.b16 %v589
        %v605 = vpack.c.b16 %v602, %v601
        %v606 = vpack.c.b16 %v604, %v603
        %v610 = vsel %vm540, %v585, 0
        %612 = vmatprep.subr.bf16.mxu0 0
        %613 = vmatpush1.bf16.msra.mxu0 %v605
        %614 = vmatprep.subr.bf16.mxu0 0
        %615 = vmatpush1.bf16.msra.mxu0 %v606
        %616 = vmatprep.subr.bf16.mxu0 0
        %617 = vmatpush1.bf16.msra.mxu0 0
        %618 = vmatprep.subr.bf16.mxu0 0
        %619 = vmatpush1.bf16.msra.mxu0 0
        %620 = vmatprep.subr.bf16.mxu0 0
        %621 = vmatpush1.bf16.msra.mxu0 0
        %622 = vmatprep.subr.bf16.mxu0 0
        %623 = vmatpush1.bf16.msra.mxu0 0
        %624 = vmatprep.subr.bf16.mxu0 0
        %625 = vmatpush1.bf16.msra.mxu0 0
        %626 = vmatprep.subr.bf16.mxu0 0
        %627 = vmatpush1.bf16.msra.mxu0 0
        %628 = vmatprep.subr.bf16.mxu0 0
        %629 = vmatpush1.bf16.msra.mxu0 0
        %630 = vmatprep.subr.bf16.mxu0 0
        %631 = vmatpush1.bf16.msra.mxu0 0
        %632 = vmatprep.subr.bf16.mxu0 0
        %633 = vmatpush1.bf16.msra.mxu0 0
        %634 = vmatprep.subr.bf16.mxu0 0
        %635 = vmatpush1.bf16.msra.mxu0 0
        %636 = vmatprep.subr.bf16.mxu0 0
        %637 = vmatpush1.bf16.msra.mxu0 0
        %638 = vmatprep.subr.bf16.mxu0 0
        %639 = vmatpush1.bf16.msra.mxu0 0
        %640 = vmatprep.subr.bf16.mxu0 0
        %641 = vmatpush1.bf16.msra.mxu0 0
        %642 = vmatprep.subr.bf16.mxu0 0
        %643 = vmatpush1.bf16.msra.mxu0 0
        %644 = vmatprep.mubr.bf16.mxu0 0
        %645 = vmatmul.mubr.bf16.gmra.mrb[0].mxu0 %v610
        %v646 = vpop.f32.mrb[0].mxu0
        %v647 = vadd.f32 %v595, %v646
        %v648 = vpop.f32.mrb[0].mxu0
        %v649 = vpop.f32.mrb[0].mxu0
        %v650 = vpop.f32.mrb[0].mxu0
        %651 = vdwg.mxu0
        %v652 = vpack.c.bf16 %v647, %v647
        %v653 = vld [vmem:[%s454] sm:$0xf]
        %v654 = vld [vmem:[#allocation11] sm:$0xf]
        %v655 = vld [vmem:[#allocation11 + $0x4] sm:$0xf]
        %v656 = vld [vmem:[#allocation11 + $0x8] sm:$0xf]
        %v657 = vld [vmem:[#allocation11 + $0xc] sm:$0xf]
        %v658 = vld [vmem:[#allocation12] sm:$0x1]
        %v660 = vlaneseq
        %v661 = vshrl.u32 %v660, 7
        %v662 = vsub.s32 0, %v661
        %v663 = vrot.slane %v658, %v662
        %v669 = vunpack.c.l.b16 %v654
        %v670 = vunpack.c.l.b16 %v655
        %v671 = vunpack.c.l.b16 %v656
        %v672 = vunpack.c.l.b16 %v657
        %v673 = vpack.c.b16 %v670, %v669
        %v674 = vpack.c.b16 %v672, %v671
        %v678 = vsel %vm540, %v653, 0
        %680 = vmatprep.subr.bf16.mxu0 0
        %681 = vmatpush1.bf16.msra.mxu0 %v673
        %682 = vmatprep.subr.bf16.mxu0 0
        %683 = vmatpush1.bf16.msra.mxu0 %v674
        %684 = vmatprep.subr.bf16.mxu0 0
        %685 = vmatpush1.bf16.msra.mxu0 0
        %686 = vmatprep.subr.bf16.mxu0 0
        %687 = vmatpush1.bf16.msra.mxu0 0
        %688 = vmatprep.subr.bf16.mxu0 0
        %689 = vmatpush1.bf16.msra.mxu0 0
        %690 = vmatprep.subr.bf16.mxu0 0
        %691 = vmatpush1.bf16.msra.mxu0 0
        %692 = vmatprep.subr.bf16.mxu0 0
        %693 = vmatpush1.bf16.msra.mxu0 0
        %694 = vmatprep.subr.bf16.mxu0 0
        %695 = vmatpush1.bf16.msra.mxu0 0
        %696 = vmatprep.subr.bf16.mxu0 0
        %697 = vmatpush1.bf16.msra.mxu0 0
        %698 = vmatprep.subr.bf16.mxu0 0
        %699 = vmatpush1.bf16.msra.mxu0 0
        %700 = vmatprep.subr.bf16.mxu0 0
        %701 = vmatpush1.bf16.msra.mxu0 0
        %702 = vmatprep.subr.bf16.mxu0 0
        %703 = vmatpush1.bf16.msra.mxu0 0
        %704 = vmatprep.subr.bf16.mxu0 0
        %705 = vmatpush1.bf16.msra.mxu0 0
        %706 = vmatprep.subr.bf16.mxu0 0
        %707 = vmatpush1.bf16.msra.mxu0 0
        %708 = vmatprep.subr.bf16.mxu0 0
        %709 = vmatpush1.bf16.msra.mxu0 0
        %710 = vmatprep.subr.bf16.mxu0 0
        %711 = vmatpush1.bf16.msra.mxu0 0
        %712 = vmatprep.mubr.bf16.mxu0 0
        %713 = vmatmul.mubr.bf16.gmra.mrb[0].mxu0 %v678
        %v714 = vpop.f32.mrb[0].mxu0
        %v715 = vadd.f32 %v663, %v714
        %v716 = vpop.f32.mrb[0].mxu0
        %v717 = vpop.f32.mrb[0].mxu0
        %v718 = vpop.f32.mrb[0].mxu0
        %719 = vdwg.mxu0
        %v720 = vpack.c.bf16 %v715, %v715
        %721 = vst.msk [vmem:[#allocation2] sm:$0xff] %vm540, 0.0
        %vm722 = vcmask 64512
        %v724 = vsel %vm722, %v584, 0
        %v727 = vsel %vm722, %v652, 0
        %729 = vmatprep.subr.bf16.mxu0 0
        %730 = vmatpush1.bf16.xpose.msra.mxu0 %v727
        %731 = vmatprep.subr.bf16.mxu0 0
        %732 = vmatpush1.bf16.xpose.msra.mxu0 0
        %733 = vmatprep.subr.bf16.mxu0 0
        %734 = vmatpush1.bf16.xpose.msra.mxu0 0
        %735 = vmatprep.subr.bf16.mxu0 0
        %736 = vmatpush1.bf16.xpose.msra.mxu0 0
        %737 = vmatprep.subr.bf16.mxu0 0
        %738 = vmatpush1.bf16.xpose.msra.mxu0 0
        %739 = vmatprep.subr.bf16.mxu0 0
        %740 = vmatpush1.bf16.xpose.msra.mxu0 0
        %741 = vmatprep.subr.bf16.mxu0 0
        %742 = vmatpush1.bf16.xpose.msra.mxu0 0
        %743 = vmatprep.subr.bf16.mxu0 0
        %744 = vmatpush1.bf16.xpose.msra.mxu0 0
        %745 = vmatprep.subr.bf16.mxu0 0
        %746 = vmatpush1.bf16.xpose.msra.mxu0 0
        %747 = vmatprep.subr.bf16.mxu0 0
        %748 = vmatpush1.bf16.xpose.msra.mxu0 0
        %749 = vmatprep.subr.bf16.mxu0 0
        %750 = vmatpush1.bf16.xpose.msra.mxu0 0
        %751 = vmatprep.subr.bf16.mxu0 0
        %752 = vmatpush1.bf16.xpose.msra.mxu0 0
        %753 = vmatprep.subr.bf16.mxu0 0
        %754 = vmatpush1.bf16.xpose.msra.mxu0 0
        %755 = vmatprep.subr.bf16.mxu0 0
        %756 = vmatpush1.bf16.xpose.msra.mxu0 0
        %757 = vmatprep.subr.bf16.mxu0 0
        %758 = vmatpush1.bf16.xpose.msra.mxu0 0
        %759 = vmatprep.subr.bf16.mxu0 0
        %760 = vmatpush1.bf16.xpose.msra.mxu0 0
        %761 = vmatprep.mubr.bf16.mxu0 0
        %762 = vmatmul.mubr.bf16.gmra.mrb[0].mxu0 %v724
        %v763 = vpop.f32.mrb[0].mxu0
        %v764 = vadd.f32 0.0, %v763
        %v765 = vpop.f32.mrb[0].mxu0
        %v766 = vpop.f32.mrb[0].mxu0
        %v767 = vpop.f32.mrb[0].mxu0
        %768 = vdwg.mxu0
        %v769 = vsel %vm722, %v764, -inf
        %770 = vmax.xlane.f32.xlu0 %v769
        %v771 = vpop.xlane.xlu0 %770
        %v772 = vsub.f32 %v764, %v771
        %v773 = vmul.f32 %v772, 1.442695
        %v774 = vpow.pop %v773
        %v775 = vsel %vm722, %v774, 0.0
        %776 = vadd.xlane.f32.xlu0 %v775
        %v777 = vpop.xlane.xlu0 %776
        %v778 = vrcp.pop %v777
        %v779 = vmul.f32 %v774, %v778
        %v780 = vpack.c.bf16 %v779, %v779
        %v782 = vsel %vm722, %v780, 0
        %vm784 = vcmask 1043456
        %v786 = vsel %vm784, %v720, 0
        %788 = vmatprep.subr.bf16.mxu0 0
        %789 = vmatpush1.bf16.msra.mxu0 %v786
        %790 = vmatprep.subr.bf16.mxu0 0
        %791 = vmatpush1.bf16.msra.mxu0 0
        %792 = vmatprep.subr.bf16.mxu0 0
        %793 = vmatpush1.bf16.msra.mxu0 0
        %794 = vmatprep.subr.bf16.mxu0 0
        %795 = vmatpush1.bf16.msra.mxu0 0
        %796 = vmatprep.subr.bf16.mxu0 0
        %797 = vmatpush1.bf16.msra.mxu0 0
        %798 = vmatprep.subr.bf16.mxu0 0
        %799 = vmatpush1.bf16.msra.mxu0 0
        %800 = vmatprep.subr.bf16.mxu0 0
        %801 = vmatpush1.bf16.msra.mxu0 0
        %802 = vmatprep.subr.bf16.mxu0 0
        %803 = vmatpush1.bf16.msra.mxu0 0
        %804 = vmatprep.subr.bf16.mxu0 0
        %805 = vmatpush1.bf16.msra.mxu0 0
        %806 = vmatprep.subr.bf16.mxu0 0
        %807 = vmatpush1.bf16.msra.mxu0 0
        %808 = vmatprep.subr.bf16.mxu0 0
        %809 = vmatpush1.bf16.msra.mxu0 0
        %810 = vmatprep.subr.bf16.mxu0 0
        %811 = vmatpush1.bf16.msra.mxu0 0
        %812 = vmatprep.subr.bf16.mxu0 0
        %813 = vmatpush1.bf16.msra.mxu0 0
        %814 = vmatprep.subr.bf16.mxu0 0
        %815 = vmatpush1.bf16.msra.mxu0 0
        %816 = vmatprep.subr.bf16.mxu0 0
        %817 = vmatpush1.bf16.msra.mxu0 0
        %818 = vmatprep.subr.bf16.mxu0 0
        %819 = vmatpush1.bf16.msra.mxu0 0
        %820 = vmatprep.mubr.bf16.mxu0 0
        %821 = vmatmul.mubr.bf16.gmra.mrb[0].mxu0 %v782
        %v822 = vpop.f32.mrb[0].mxu0
        %v823 = vadd.f32 0.0, %v822
        %v824 = vpop.f32.mrb[0].mxu0
        %v825 = vpop.f32.mrb[0].mxu0
        %v826 = vpop.f32.mrb[0].mxu0
        %827 = vdwg.mxu0
        %v828 = vpack.c.bf16 %v823, %v823
        %v829 = vld [vmem:[#allocation2] sm:$0xff]
        %v830 = vld [vmem:[%s9] sm:$0xf]
        %v832 = vsel %vm722, %v828, 0
        %v835 = vsel %vm784, %v830, 0
        %837 = vmatprep.subr.bf16.mxu0 0
        %838 = vmatpush1.bf16.msra.mxu0 %v835
        %839 = vmatprep.subr.bf16.mxu0 0
        %840 = vmatpush1.bf16.msra.mxu0 0
        %841 = vmatprep.subr.bf16.mxu0 0
        %842 = vmatpush1.bf16.msra.mxu0 0
        %843 = vmatprep.subr.bf16.mxu0 0
        %844 = vmatpush1.bf16.msra.mxu0 0
        %845 = vmatprep.subr.bf16.mxu0 0
        %846 = vmatpush1.bf16.msra.mxu0 0
        %847 = vmatprep.subr.bf16.mxu0 0
        %848 = vmatpush1.bf16.msra.mxu0 0
        %849 = vmatprep.subr.bf16.mxu0 0
        %850 = vmatpush1.bf16.msra.mxu0 0
        %851 = vmatprep.subr.bf16.mxu0 0
        %852 = vmatpush1.bf16.msra.mxu0 0
        %853 = vmatprep.subr.bf16.mxu0 0
        %854 = vmatpush1.bf16.msra.mxu0 0
        %855 = vmatprep.subr.bf16.mxu0 0
        %856 = vmatpush1.bf16.msra.mxu0 0
        %857 = vmatprep.subr.bf16.mxu0 0
        %858 = vmatpush1.bf16.msra.mxu0 0
        %859 = vmatprep.subr.bf16.mxu0 0
        %860 = vmatpush1.bf16.msra.mxu0 0
        %861 = vmatprep.subr.bf16.mxu0 0
        %862 = vmatpush1.bf16.msra.mxu0 0
        %863 = vmatprep.subr.bf16.mxu0 0
        %864 = vmatpush1.bf16.msra.mxu0 0
        %865 = vmatprep.subr.bf16.mxu0 0
        %866 = vmatpush1.bf16.msra.mxu0 0
        %867 = vmatprep.subr.bf16.mxu0 0
        %868 = vmatpush1.bf16.msra.mxu0 0
        %869 = vmatprep.mubr.bf16.mxu0 0
        %870 = vmatmul.mubr.bf16.gmra.mrb[0].mxu0 %v832
        %v871 = vpop.f32.mrb[0].mxu0
        %v872 = vadd.f32 0.0, %v871
        %v873 = vpop.f32.mrb[0].mxu0
        %v874 = vpop.f32.mrb[0].mxu0
        %v875 = vpop.f32.mrb[0].mxu0
        %876 = vdwg.mxu0
        %v877 = vadd.f32 %v829, %v872
        %878 = vst.msk [vmem:[#allocation2] sm:$0xff] %vm540, %v877
        %880 = vrot.lane.b32.xlu0 %v584, 120
        %v881 = vpop.permute.xlu0 %880
        %883 = vrot.lane.b32.xlu0 %v652, 120
        %v884 = vpop.permute.xlu0 %883
        %v886 = vsel %vm722, %v881, 0
        %v889 = vsel %vm722, %v884, 0
        %891 = vmatprep.subr.bf16.mxu0 0
        %892 = vmatpush1.bf16.xpose.msra.mxu0 %v889
        %893 = vmatprep.subr.bf16.mxu0 0
        %894 = vmatpush1.bf16.xpose.msra.mxu0 0
        %895 = vmatprep.subr.bf16.mxu0 0
        %896 = vmatpush1.bf16.xpose.msra.mxu0 0
        %897 = vmatprep.subr.bf16.mxu0 0
        %898 = vmatpush1.bf16.xpose.msra.mxu0 0
        %899 = vmatprep.subr.bf16.mxu0 0
        %900 = vmatpush1.bf16.xpose.msra.mxu0 0
        %901 = vmatprep.subr.bf16.mxu0 0
        %902 = vmatpush1.bf16.xpose.msra.mxu0 0
        %903 = vmatprep.subr.bf16.mxu0 0
        %904 = vmatpush1.bf16.xpose.msra.mxu0 0
        %905 = vmatprep.subr.bf16.mxu0 0
        %906 = vmatpush1.bf16.xpose.msra.mxu0 0
        %907 = vmatprep.subr.bf16.mxu0 0
        %908 = vmatpush1.bf16.xpose.msra.mxu0 0
        %909 = vmatprep.subr.bf16.mxu0 0
        %910 = vmatpush1.bf16.xpose.msra.mxu0 0
        %911 = vmatprep.subr.bf16.mxu0 0
        %912 = vmatpush1.bf16.xpose.msra.mxu0 0
        %913 = vmatprep.subr.bf16.mxu0 0
        %914 = vmatpush1.bf16.xpose.msra.mxu0 0
        %915 = vmatprep.subr.bf16.mxu0 0
        %916 = vmatpush1.bf16.xpose.msra.mxu0 0
        %917 = vmatprep.subr.bf16.mxu0 0
        %918 = vmatpush1.bf16.xpose.msra.mxu0 0
        %919 = vmatprep.subr.bf16.mxu0 0
        %920 = vmatpush1.bf16.xpose.msra.mxu0 0
        %921 = vmatprep.subr.bf16.mxu0 0
        %922 = vmatpush1.bf16.xpose.msra.mxu0 0
        %923 = vmatprep.mubr.bf16.mxu0 0
        %924 = vmatmul.mubr.bf16.gmra.mrb[0].mxu0 %v886
        %v925 = vpop.f32.mrb[0].mxu0
        %v926 = vadd.f32 0.0, %v925
        %v927 = vpop.f32.mrb[0].mxu0
        %v928 = vpop.f32.mrb[0].mxu0
        %v929 = vpop.f32.mrb[0].mxu0
        %930 = vdwg.mxu0
        %v931 = vsel %vm722, %v926, -inf
        %932 = vmax.xlane.f32.xlu0 %v931
        %v933 = vpop.xlane.xlu0 %932
        %v934 = vsub.f32 %v926, %v933
        %v935 = vmul.f32 %v934, 1.442695
        %v936 = vpow.pop %v935
        %v937 = vsel %vm722, %v936, 0.0
        %938 = vadd.xlane.f32.xlu0 %v937
        %v939 = vpop.xlane.xlu0 %938
        %v940 = vrcp.pop %v939
        %v941 = vmul.f32 %v936, %v940
        %v942 = vpack.c.bf16 %v941, %v941
        %944 = vrot.lane.b32.xlu0 %v720, 120
        %v945 = vpop.permute.xlu0 %944
        %v947 = vsel %vm722, %v942, 0
        %v950 = vsel %vm784, %v945, 0
        %952 = vmatprep.subr.bf16.mxu0 0
        %953 = vmatpush1.bf16.msra.mxu0 %v950
        %954 = vmatprep.subr.bf16.mxu0 0
        %955 = vmatpush1.bf16.msra.mxu0 0
        %956 = vmatprep.subr.bf16.mxu0 0
        %957 = vmatpush1.bf16.msra.mxu0 0
        %958 = vmatprep.subr.bf16.mxu0 0
        %959 = vmatpush1.bf16.msra.mxu0 0
        %960 = vmatprep.subr.bf16.mxu0 0
        %961 = vmatpush1.bf16.msra.mxu0 0
        %962 = vmatprep.subr.bf16.mxu0 0
        %963 = vmatpush1.bf16.msra.mxu0 0
        %964 = vmatprep.subr.bf16.mxu0 0
        %965 = vmatpush1.bf16.msra.mxu0 0
        %966 = vmatprep.subr.bf16.mxu0 0
        %967 = vmatpush1.bf16.msra.mxu0 0
        %968 = vmatprep.subr.bf16.mxu0 0
        %969 = vmatpush1.bf16.msra.mxu0 0
        %970 = vmatprep.subr.bf16.mxu0 0
        %971 = vmatpush1.bf16.msra.mxu0 0
        %972 = vmatprep.subr.bf16.mxu0 0
        %973 = vmatpush1.bf16.msra.mxu0 0
        %974 = vmatprep.subr.bf16.mxu0 0
        %975 = vmatpush1.bf16.msra.mxu0 0
        %976 = vmatprep.subr.bf16.mxu0 0
        %977 = vmatpush1.bf16.msra.mxu0 0
        %978 = vmatprep.subr.bf16.mxu0 0
        %979 = vmatpush1.bf16.msra.mxu0 0
        %980 = vmatprep.subr.bf16.mxu0 0
        %981 = vmatpush1.bf16.msra.mxu0 0
        %982 = vmatprep.subr.bf16.mxu0 0
        %983 = vmatpush1.bf16.msra.mxu0 0
        %984 = vmatprep.mubr.bf16.mxu0 0
        %985 = vmatmul.mubr.bf16.gmra.mrb[0].mxu0 %v947
        %v986 = vpop.f32.mrb[0].mxu0
        %v987 = vadd.f32 0.0, %v986
        %v988 = vpop.f32.mrb[0].mxu0
        %v989 = vpop.f32.mrb[0].mxu0
        %v990 = vpop.f32.mrb[0].mxu0
        %991 = vdwg.mxu0
        %v992 = vpack.c.bf16 %v987, %v987
        %v993 = vld [vmem:[#allocation2] sm:$0xff]
        %v994 = vld [vmem:[%s9 + $0x4] sm:$0xf]
        %v996 = vsel %vm722, %v992, 0
        %v999 = vsel %vm784, %v994, 0
        %1001 = vmatprep.subr.bf16.mxu0 0
        %1002 = vmatpush1.bf16.msra.mxu0 %v999
        %1003 = vmatprep.subr.bf16.mxu0 0
        %1004 = vmatpush1.bf16.msra.mxu0 0
        %1005 = vmatprep.subr.bf16.mxu0 0
        %1006 = vmatpush1.bf16.msra.mxu0 0
        %1007 = vmatprep.subr.bf16.mxu0 0
        %1008 = vmatpush1.bf16.msra.mxu0 0
        %1009 = vmatprep.subr.bf16.mxu0 0
        %1010 = vmatpush1.bf16.msra.mxu0 0
        %1011 = vmatprep.subr.bf16.mxu0 0
        %1012 = vmatpush1.bf16.msra.mxu0 0
        %1013 = vmatprep.subr.bf16.mxu0 0
        %1014 = vmatpush1.bf16.msra.mxu0 0
        %1015 = vmatprep.subr.bf16.mxu0 0
        %1016 = vmatpush1.bf16.msra.mxu0 0
        %1017 = vmatprep.subr.bf16.mxu0 0
        %1018 = vmatpush1.bf16.msra.mxu0 0
        %1019 = vmatprep.subr.bf16.mxu0 0
        %1020 = vmatpush1.bf16.msra.mxu0 0
        %1021 = vmatprep.subr.bf16.mxu0 0
        %1022 = vmatpush1.bf16.msra.mxu0 0
        %1023 = vmatprep.subr.bf16.mxu0 0
        %1024 = vmatpush1.bf16.msra.mxu0 0
        %1025 = vmatprep.subr.bf16.mxu0 0
        %1026 = vmatpush1.bf16.msra.mxu0 0
        %1027 = vmatprep.subr.bf16.mxu0 0
        %1028 = vmatpush1.bf16.msra.mxu0 0
        %1029 = vmatprep.subr.bf16.mxu0 0
        %1030 = vmatpush1.bf16.msra.mxu0 0
        %1031 = vmatprep.subr.bf16.mxu0 0
        %1032 = vmatpush1.bf16.msra.mxu0 0
        %1033 = vmatprep.mubr.bf16.mxu0 0
        %1034 = vmatmul.mubr.bf16.gmra.mrb[0].mxu0 %v996
        %v1035 = vpop.f32.mrb[0].mxu0
        %v1036 = vadd.f32 0.0, %v1035
        %v1037 = vpop.f32.mrb[0].mxu0
        %v1038 = vpop.f32.mrb[0].mxu0
        %v1039 = vpop.f32.mrb[0].mxu0
        %1040 = vdwg.mxu0
        %v1041 = vadd.f32 %v993, %v1036
        %1042 = vst.msk [vmem:[#allocation2] sm:$0xff] %vm540, %v1041
        %1043 = vrot.lane.b32.xlu0 %v584, 112
        %v1044 = vpop.permute.xlu0 %1043
        %1045 = vrot.lane.b32.xlu0 %v652, 112
        %v1046 = vpop.permute.xlu0 %1045
        %v1048 = vsel %vm722, %v1044, 0
        %v1051 = vsel %vm722, %v1046, 0
        %1053 = vmatprep.subr.bf16.mxu0 0
        %1054 = vmatpush1.bf16.xpose.msra.mxu0 %v1051
        %1055 = vmatprep.subr.bf16.mxu0 0
        %1056 = vmatpush1.bf16.xpose.msra.mxu0 0
        %1057 = vmatprep.subr.bf16.mxu0 0
        %1058 = vmatpush1.bf16.xpose.msra.mxu0 0
        %1059 = vmatprep.subr.bf16.mxu0 0
        %1060 = vmatpush1.bf16.xpose.msra.mxu0 0
        %1061 = vmatprep.subr.bf16.mxu0 0
        %1062 = vmatpush1.bf16.xpose.msra.mxu0 0
        %1063 = vmatprep.subr.bf16.mxu0 0
        %1064 = vmatpush1.bf16.xpose.msra.mxu0 0
        %1065 = vmatprep.subr.bf16.mxu0 0
        %1066 = vmatpush1.bf16.xpose.msra.mxu0 0
        %1067 = vmatprep.subr.bf16.mxu0 0
        %1068 = vmatpush1.bf16.xpose.msra.mxu0 0
        %1069 = vmatprep.subr.bf16.mxu0 0
        %1070 = vmatpush1.bf16.xpose.msra.mxu0 0
        %1071 = vmatprep.subr.bf16.mxu0 0
        %1072 = vmatpush1.bf16.xpose.msra.mxu0 0
        %1073 = vmatprep.subr.bf16.mxu0 0
        %1074 = vmatpush1.bf16.xpose.msra.mxu0 0
        %1075 = vmatprep.subr.bf16.mxu0 0
        %1076 = vmatpush1.bf16.xpose.msra.mxu0 0
        %1077 = vmatprep.subr.bf16.mxu0 0
        %1078 = vmatpush1.bf16.xpose.msra.mxu0 0
        %1079 = vmatprep.subr.bf16.mxu0 0
        %1080 = vmatpush1.bf16.xpose.msra.mxu0 0
        %1081 = vmatprep.subr.bf16.mxu0 0
        %1082 = vmatpush1.bf16.xpose.msra.mxu0 0
        %1083 = vmatprep.subr.bf16.mxu0 0
        %1084 = vmatpush1.bf16.xpose.msra.mxu0 0
        %1085 = vmatprep.mubr.bf16.mxu0 0
        %1086 = vmatmul.mubr.bf16.gmra.mrb[0].mxu0 %v1048
        %v1087 = vpop.f32.mrb[0].mxu0
        %v1088 = vadd.f32 0.0, %v1087
        %v1089 = vpop.f32.mrb[0].mxu0
        %v1090 = vpop.f32.mrb[0].mxu0
        %v1091 = vpop.f32.mrb[0].mxu0
        %1092 = vdwg.mxu0
        %v1093 = vsel %vm722, %v1088, -inf
        %1094 = vmax.xlane.f32.xlu0 %v1093
        %v1095 = vpop.xlane.xlu0 %1094
        %v1096 = vsub.f32 %v1088, %v1095
        %v1097 = vmul.f32 %v1096, 1.442695
        %v1098 = vpow.pop %v1097
        %v1099 = vsel %vm722, %v1098, 0.0
        %1100 = vadd.xlane.f32.xlu0 %v1099
        %v1101 = vpop.xlane.xlu0 %1100
        %v1102 = vrcp.pop %v1101
        %v1103 = vmul.f32 %v1098, %v1102
        %v1104 = vpack.c.bf16 %v1103, %v1103
        %1105 = vrot.lane.b32.xlu0 %v720, 112
        %v1106 = vpop.permute.xlu0 %1105
        %v1108 = vsel %vm722, %v1104, 0
        %v1111 = vsel %vm784, %v1106, 0
        %1113 = vmatprep.subr.bf16.mxu0 0
        %1114 = vmatpush1.bf16.msra.mxu0 %v1111
        %1115 = vmatprep.subr.bf16.mxu0 0
        %1116 = vmatpush1.bf16.msra.mxu0 0
        %1117 = vmatprep.subr.bf16.mxu0 0
        %1118 = vmatpush1.bf16.msra.mxu0 0
        %1119 = vmatprep.subr.bf16.mxu0 0
        %1120 = vmatpush1.bf16.msra.mxu0 0
        %1121 = vmatprep.subr.bf16.mxu0 0
        %1122 = vmatpush1.bf16.msra.mxu0 0
        %1123 = vmatprep.subr.bf16.mxu0 0
        %1124 = vmatpush1.bf16.msra.mxu0 0
        %1125 = vmatprep.subr.bf16.mxu0 0
        %1126 = vmatpush1.bf16.msra.mxu0 0
        %1127 = vmatprep.subr.bf16.mxu0 0
        %1128 = vmatpush1.bf16.msra.mxu0 0
        %1129 = vmatprep.subr.bf16.mxu0 0
        %1130 = vmatpush1.bf16.msra.mxu0 0
        %1131 = vmatprep.subr.bf16.mxu0 0
        %1132 = vmatpush1.bf16.msra.mxu0 0
        %1133 = vmatprep.subr.bf16.mxu0 0
        %1134 = vmatpush1.bf16.msra.mxu0 0
        %1135 = vmatprep.subr.bf16.mxu0 0
        %1136 = vmatpush1.bf16.msra.mxu0 0
        %1137 = vmatprep.subr.bf16.mxu0 0
        %1138 = vmatpush1.bf16.msra.mxu0 0
        %1139 = vmatprep.subr.bf16.mxu0 0
        %1140 = vmatpush1.bf16.msra.mxu0 0
        %1141 = vmatprep.subr.bf16.mxu0 0
        %1142 = vmatpush1.bf16.msra.mxu0 0
        %1143 = vmatprep.subr.bf16.mxu0 0
        %1144 = vmatpush1.bf16.msra.mxu0 0
        %1145 = vmatprep.mubr.bf16.mxu0 0
        %1146 = vmatmul.mubr.bf16.gmra.mrb[0].mxu0 %v1108
        %v1147 = vpop.f32.mrb[0].mxu0
        %v1148 = vadd.f32 0.0, %v1147
        %v1149 = vpop.f32.mrb[0].mxu0
        %v1150 = vpop.f32.mrb[0].mxu0
        %v1151 = vpop.f32.mrb[0].mxu0
        %1152 = vdwg.mxu0
        %v1153 = vpack.c.bf16 %v1148, %v1148
        %v1154 = vld [vmem:[#allocation2] sm:$0xff]
        %v1155 = vld [vmem:[%s9 + $0x8] sm:$0xf]
        %v1157 = vsel %vm722, %v1153, 0
        %v1160 = vsel %vm784, %v1155, 0
        %1162 = vmatprep.subr.bf16.mxu0 0
        %1163 = vmatpush1.bf16.msra.mxu0 %v1160
        %1164 = vmatprep.subr.bf16.mxu0 0
        %1165 = vmatpush1.bf16.msra.mxu0 0
        %1166 = vmatprep.subr.bf16.mxu0 0
        %1167 = vmatpush1.bf16.msra.mxu0 0
        %1168 = vmatprep.subr.bf16.mxu0 0
        %1169 = vmatpush1.bf16.msra.mxu0 0
        %1170 = vmatprep.subr.bf16.mxu0 0
        %1171 = vmatpush1.bf16.msra.mxu0 0
        %1172 = vmatprep.subr.bf16.mxu0 0
        %1173 = vmatpush1.bf16.msra.mxu0 0
        %1174 = vmatprep.subr.bf16.mxu0 0
        %1175 = vmatpush1.bf16.msra.mxu0 0
        %1176 = vmatprep.subr.bf16.mxu0 0
        %1177 = vmatpush1.bf16.msra.mxu0 0
        %1178 = vmatprep.subr.bf16.mxu0 0
        %1179 = vmatpush1.bf16.msra.mxu0 0
        %1180 = vmatprep.subr.bf16.mxu0 0
        %1181 = vmatpush1.bf16.msra.mxu0 0
        %1182 = vmatprep.subr.bf16.mxu0 0
        %1183 = vmatpush1.bf16.msra.mxu0 0
        %1184 = vmatprep.subr.bf16.mxu0 0
        %1185 = vmatpush1.bf16.msra.mxu0 0
        %1186 = vmatprep.subr.bf16.mxu0 0
        %1187 = vmatpush1.bf16.msra.mxu0 0
        %1188 = vmatprep.subr.bf16.mxu0 0
        %1189 = vmatpush1.bf16.msra.mxu0 0
        %1190 = vmatprep.subr.bf16.mxu0 0
        %1191 = vmatpush1.bf16.msra.mxu0 0
        %1192 = vmatprep.subr.bf16.mxu0 0
        %1193 = vmatpush1.bf16.msra.mxu0 0
        %1194 = vmatprep.mubr.bf16.mxu0 0
        %1195 = vmatmul.mubr.bf16.gmra.mrb[0].mxu0 %v1157
        %v1196 = vpop.f32.mrb[0].mxu0
        %v1197 = vadd.f32 0.0, %v1196
        %v1198 = vpop.f32.mrb[0].mxu0
        %v1199 = vpop.f32.mrb[0].mxu0
        %v1200 = vpop.f32.mrb[0].mxu0
        %1201 = vdwg.mxu0
        %v1202 = vadd.f32 %v1154, %v1197
        %1203 = vst.msk [vmem:[#allocation2] sm:$0xff] %vm540, %v1202
        %1204 = vrot.lane.b32.xlu0 %v584, 104
        %v1205 = vpop.permute.xlu0 %1204
        %1206 = vrot.lane.b32.xlu0 %v652, 104
        %v1207 = vpop.permute.xlu0 %1206
        %v1209 = vsel %vm722, %v1205, 0
        %v1212 = vsel %vm722, %v1207, 0
        %1214 = vmatprep.subr.bf16.mxu0 0
        %1215 = vmatpush1.bf16.xpose.msra.mxu0 %v1212
        %1216 = vmatprep.subr.bf16.mxu0 0
        %1217 = vmatpush1.bf16.xpose.msra.mxu0 0
        %1218 = vmatprep.subr.bf16.mxu0 0
        %1219 = vmatpush1.bf16.xpose.msra.mxu0 0
        %1220 = vmatprep.subr.bf16.mxu0 0
        %1221 = vmatpush1.bf16.xpose.msra.mxu0 0
        %1222 = vmatprep.subr.bf16.mxu0 0
        %1223 = vmatpush1.bf16.xpose.msra.mxu0 0
        %1224 = vmatprep.subr.bf16.mxu0 0
        %1225 = vmatpush1.bf16.xpose.msra.mxu0 0
        %1226 = vmatprep.subr.bf16.mxu0 0
        %1227 = vmatpush1.bf16.xpose.msra.mxu0 0
        %1228 = vmatprep.subr.bf16.mxu0 0
        %1229 = vmatpush1.bf16.xpose.msra.mxu0 0
        %1230 = vmatprep.subr.bf16.mxu0 0
        %1231 = vmatpush1.bf16.xpose.msra.mxu0 0
        %1232 = vmatprep.subr.bf16.mxu0 0
        %1233 = vmatpush1.bf16.xpose.msra.mxu0 0
        %1234 = vmatprep.subr.bf16.mxu0 0
        %1235 = vmatpush1.bf16.xpose.msra.mxu0 0
        %1236 = vmatprep.subr.bf16.mxu0 0
        %1237 = vmatpush1.bf16.xpose.msra.mxu0 0
        %1238 = vmatprep.subr.bf16.mxu0 0
        %1239 = vmatpush1.bf16.xpose.msra.mxu0 0
        %1240 = vmatprep.subr.bf16.mxu0 0
        %1241 = vmatpush1.bf16.xpose.msra.mxu0 0
        %1242 = vmatprep.subr.bf16.mxu0 0
        %1243 = vmatpush1.bf16.xpose.msra.mxu0 0
        %1244 = vmatprep.subr.bf16.mxu0 0
        %1245 = vmatpush1.bf16.xpose.msra.mxu0 0
        %1246 = vmatprep.mubr.bf16.mxu0 0
        %1247 = vmatmul.mubr.bf16.gmra.mrb[0].mxu0 %v1209
        %v1248 = vpop.f32.mrb[0].mxu0
        %v1249 = vadd.f32 0.0, %v1248
        %v1250 = vpop.f32.mrb[0].mxu0
        %v1251 = vpop.f32.mrb[0].mxu0
        %v1252 = vpop.f32.mrb[0].mxu0
        %1253 = vdwg.mxu0
        %v1254 = vsel %vm722, %v1249, -inf
        %1255 = vmax.xlane.f32.xlu0 %v1254
        %v1256 = vpop.xlane.xlu0 %1255
        %v1257 = vsub.f32 %v1249, %v1256
        %v1258 = vmul.f32 %v1257, 1.442695
        %v1259 = vpow.pop %v1258
        %v1260 = vsel %vm722, %v1259, 0.0
        %1261 = vadd.xlane.f32.xlu0 %v1260
        %v1262 = vpop.xlane.xlu0 %1261
        %v1263 = vrcp.pop %v1262
        %v1264 = vmul.f32 %v1259, %v1263
        %v1265 = vpack.c.bf16 %v1264, %v1264
        %1266 = vrot.lane.b32.xlu0 %v720, 104
        %v1267 = vpop.permute.xlu0 %1266
        %v1269 = vsel %vm722, %v1265, 0
        %v1272 = vsel %vm784, %v1267, 0
        %1274 = vmatprep.subr.bf16.mxu0 0
        %1275 = vmatpush1.bf16.msra.mxu0 %v1272
        %1276 = vmatprep.subr.bf16.mxu0 0
        %1277 = vmatpush1.bf16.msra.mxu0 0
        %1278 = vmatprep.subr.bf16.mxu0 0
        %1279 = vmatpush1.bf16.msra.mxu0 0
        %1280 = vmatprep.subr.bf16.mxu0 0
        %1281 = vmatpush1.bf16.msra.mxu0 0
        %1282 = vmatprep.subr.bf16.mxu0 0
        %1283 = vmatpush1.bf16.msra.mxu0 0
        %1284 = vmatprep.subr.bf16.mxu0 0
        %1285 = vmatpush1.bf16.msra.mxu0 0
        %1286 = vmatprep.subr.bf16.mxu0 0
        %1287 = vmatpush1.bf16.msra.mxu0 0
        %1288 = vmatprep.subr.bf16.mxu0 0
        %1289 = vmatpush1.bf16.msra.mxu0 0
        %1290 = vmatprep.subr.bf16.mxu0 0
        %1291 = vmatpush1.bf16.msra.mxu0 0
        %1292 = vmatprep.subr.bf16.mxu0 0
        %1293 = vmatpush1.bf16.msra.mxu0 0
        %1294 = vmatprep.subr.bf16.mxu0 0
        %1295 = vmatpush1.bf16.msra.mxu0 0
        %1296 = vmatprep.subr.bf16.mxu0 0
        %1297 = vmatpush1.bf16.msra.mxu0 0
        %1298 = vmatprep.subr.bf16.mxu0 0
        %1299 = vmatpush1.bf16.msra.mxu0 0
        %1300 = vmatprep.subr.bf16.mxu0 0
        %1301 = vmatpush1.bf16.msra.mxu0 0
        %1302 = vmatprep.subr.bf16.mxu0 0
        %1303 = vmatpush1.bf16.msra.mxu0 0
        %1304 = vmatprep.subr.bf16.mxu0 0
        %1305 = vmatpush1.bf16.msra.mxu0 0
        %1306 = vmatprep.mubr.bf16.mxu0 0
        %1307 = vmatmul.mubr.bf16.gmra.mrb[0].mxu0 %v1269
        %v1308 = vpop.f32.mrb[0].mxu0
        %v1309 = vadd.f32 0.0, %v1308
        %v1310 = vpop.f32.mrb[0].mxu0
        %v1311 = vpop.f32.mrb[0].mxu0
        %v1312 = vpop.f32.mrb[0].mxu0
        %1313 = vdwg.mxu0
        %v1314 = vpack.c.bf16 %v1309, %v1309
        %v1315 = vld [vmem:[#allocation2] sm:$0xff]
        %v1316 = vld [vmem:[%s9 + $0xc] sm:$0xf]
        %v1318 = vsel %vm722, %v1314, 0
        %v1321 = vsel %vm784, %v1316, 0
        %1323 = vmatprep.subr.bf16.mxu0 0
        %1324 = vmatpush1.bf16.msra.mxu0 %v1321
        %1325 = vmatprep.subr.bf16.mxu0 0
        %1326 = vmatpush1.bf16.msra.mxu0 0
        %1327 = vmatprep.subr.bf16.mxu0 0
        %1328 = vmatpush1.bf16.msra.mxu0 0
        %1329 = vmatprep.subr.bf16.mxu0 0
        %1330 = vmatpush1.bf16.msra.mxu0 0
        %1331 = vmatprep.subr.bf16.mxu0 0
        %1332 = vmatpush1.bf16.msra.mxu0 0
        %1333 = vmatprep.subr.bf16.mxu0 0
        %1334 = vmatpush1.bf16.msra.mxu0 0
        %1335 = vmatprep.subr.bf16.mxu0 0
        %1336 = vmatpush1.bf16.msra.mxu0 0
        %1337 = vmatprep.subr.bf16.mxu0 0
        %1338 = vmatpush1.bf16.msra.mxu0 0
        %1339 = vmatprep.subr.bf16.mxu0 0
        %1340 = vmatpush1.bf16.msra.mxu0 0
        %1341 = vmatprep.subr.bf16.mxu0 0
        %1342 = vmatpush1.bf16.msra.mxu0 0
        %1343 = vmatprep.subr.bf16.mxu0 0
        %1344 = vmatpush1.bf16.msra.mxu0 0
        %1345 = vmatprep.subr.bf16.mxu0 0
        %1346 = vmatpush1.bf16.msra.mxu0 0
        %1347 = vmatprep.subr.bf16.mxu0 0
        %1348 = vmatpush1.bf16.msra.mxu0 0
        %1349 = vmatprep.subr.bf16.mxu0 0
        %1350 = vmatpush1.bf16.msra.mxu0 0
        %1351 = vmatprep.subr.bf16.mxu0 0
        %1352 = vmatpush1.bf16.msra.mxu0 0
        %1353 = vmatprep.subr.bf16.mxu0 0
        %1354 = vmatpush1.bf16.msra.mxu0 0
        %1355 = vmatprep.mubr.bf16.mxu0 0
        %1356 = vmatmul.mubr.bf16.gmra.mrb[0].mxu0 %v1318
        %v1357 = vpop.f32.mrb[0].mxu0
        %v1358 = vadd.f32 0.0, %v1357
        %v1359 = vpop.f32.mrb[0].mxu0
        %v1360 = vpop.f32.mrb[0].mxu0
        %v1361 = vpop.f32.mrb[0].mxu0
        %1362 = vdwg.mxu0
        %v1363 = vadd.f32 %v1315, %v1358
        %1364 = vst.msk [vmem:[#allocation2] sm:$0xff] %vm540, %v1363
        %v1365 = vld [vmem:[#allocation2] sm:$0xff]
        %v1366 = vld [vmem:[%s10] sm:$0x1]
        %v1368 = vlaneseq
        %v1369 = vshrl.u32 %v1368, 7
        %v1370 = vsub.s32 0, %v1369
        %v1371 = vrot.slane %v1366, %v1370
        %v1373 = vadd.f32 %v1365, %v1371
        %1374 = vst.msk [vmem:[%s514] sm:$0xff] %vm540, %v1373
        %s1375 = sand.u32 %s287, 1
        %s1376 = scalar_lea.sflag [#allocation5], %s1375
        %s1377 = sand.u32 %s287, 1
        %s1378 = smul.addr %s1377, 8
        %s1379 = scalar_lea.vmem [#allocation14], %s1378
        // Predicated region
        $region89: #{tpu_custom_call.1} parent=63 // pred_check
          %p1380 = pneg %p297
        $region90: #{tpu_custom_call.1} parent=63 // pred_check_branch
          %1382 = sbr.rel (%p1380) target = $region92
        $region91: #{tpu_custom_call.1} parent=63 // pred_region
          %s1384 = ssub.s32 128, 128
          %1385 = vsyncadd %s1376, %s1384
          %s1386 = smul.addr %s33, 128
          %s1387 = scalar_lea.hbm %s11, %s1386
          %s1389 = sshll.u32 %s1379, 4
          %s1390 = int_to_ptr.vmem [resolvable:$true] %s1389
          %1392 = dma.vmem_to_hbm [thread:$0]  %s1390, 128, %s1387, %s1376
        $region92: #{tpu_custom_call.1} parent=63 // pred_fallthru
          _
      $region64: #{tpu_custom_call.1} parent=5 // pred_fallthru
        _
      %p1393 = scmp.le.s32.totalorder 2, %s28
      // Predicated region
      $region93: #{tpu_custom_call.1} parent=5 // pred_check
        %p1394 = pneg %p1393
      $region94: #{tpu_custom_call.1} parent=5 // pred_check_branch
        %1396 = sbr.rel (%p1394) target = $region96
      $region95: #{tpu_custom_call.1} parent=5 // pred_region
        %s1397 = ssub.s32 %s28, 2
        // Predicated region
        $region97: #{tpu_custom_call.1} parent=95 // pred_check
          %p1398 = pneg %p303
        $region98: #{tpu_custom_call.1} parent=95 // pred_check_branch
          %1400 = sbr.rel (%p1398) target = $region100
        $region99: #{tpu_custom_call.1} parent=95 // pred_region
          %s1401 = sand.u32 %s288, 1
          %s1402 = scalar_lea.sflag [#allocation5], %s1401
          %s1403 = sand.u32 %s288, 1
          %s1404 = smul.addr %s1403, 8
          %s1405 = scalar_lea.vmem [#allocation14], %s1404
          %1406 = dma.done %s1402, 128
        $region100: #{tpu_custom_call.1} parent=95 // pred_fallthru
          _
      $region96: #{tpu_custom_call.1} parent=5 // pred_fallthru
        _
    $region6: #{tpu_custom_call.1} parent=1 // loop_footer
      %s32 = sadd.s32 1, %s28
    $region7: #{tpu_custom_call.1} parent=1 // loop_footer_branch
      %27 = sbr.rel target = $region3
    $region8: #{tpu_custom_call.1} parent=1 // loop_exit
      _
    %1407 = vsyncpa [#allocation4], 1
    %s1408 = scalar_lea.sflag [#allocation4], 1
    %1409 = vsyncpa %s1408, 1
    %1410 = vsyncpa [#allocation7], 1
    %s1411 = scalar_lea.sflag [#allocation7], 1
    %1412 = vsyncpa %s1411, 1
    %1413 = vsyncpa [#allocation10], 1
    %1414 = vsyncpa [#allocation13], 1
    %1415 = vsyncpa [#allocation5], 1
    %s1416 = scalar_lea.sflag [#allocation5], 1
    %1417 = vsyncpa %s1416, 1

</llo_original>
